<compile_context>
chip_gen: v6e
topology: v6e:2x2x1
jax: 0.10.0
libtpu: 0.0.40
codegen_flags: <defaults>
</compile_context>

<pallas_src>
import jax
import jax.numpy as jnp
from jax import lax
from jax.experimental import pallas as pl
from jax.experimental.pallas import tpu as pltpu


# ----------------------------------------------------------------------------
# Geometry constants (28x28 input, as required by fc1 = Linear(16*14*14, 10))
# ----------------------------------------------------------------------------
_H = 28                      # conv1 spatial size
_PW1 = _H + 2                # padded row width for conv1 band (30)
_B1 = _PW1 * (_H - 1) + _H   # conv1 band length: 30*27 + 28 = 838
_MM = 60 * 13 + 2 * 13 + 1   # pooled-max band length: 807
_HP = _H // 2                # pooled spatial size (14)
_PW2 = _HP + 2               # padded row width for conv2 band (16)
_PP = _PW2 * _PW2            # padded pooled plane (256)
_B2 = _PW2 * (_HP - 1) + _HP  # conv2 band length: 16*13 + 14 = 222
_NCLS = 128                  # lane-padded class dimension


# ----------------------------------------------------------------------------
# Fused kernel
# ----------------------------------------------------------------------------
def _cnnet_kernel(x_ref, w1_ref, b1_ref, w2_ref, b2_ref, wfc_ref, bfc_ref,
                  out_ref, xs_ref, pool_ref):
    tb = out_ref.shape[0]

    # -- stage the zero-padded input band: xs[b, 30*(i+1) + (j+1)] = x[b, i, j]
    xs_ref[...] = jnp.zeros(xs_ref.shape, xs_ref.dtype)
    for i in range(_H):
        row = x_ref[:, i * _H:(i + 1) * _H]                       # (tb, 28)
        base = _PW1 * (i + 1) + 1
        xs_ref[:, base:base + _H] = row

    # -- 0/1 selection matrix: picks pooled values at r = 60*ii + 2*jj and drops them
    #    into the zero-padded 16x16 pooled band position s = 16*ii + jj + 17.
    r_idx = lax.broadcasted_iota(jnp.int32, (_MM, _PP), 0)
    s_idx = lax.broadcasted_iota(jnp.int32, (_MM, _PP), 1)
    u = s_idx - (_PW2 + 1)
    ii = u >> 4
    jj = u & 15
    sel = jnp.where((u >= 0) & (ii < _HP) & (jj < _HP)
                    & (r_idx == ii * 60 + jj * 2),
                    1.0, 0.0).astype(jnp.float32)

    # -- conv1 (1->8, 3x3, pad 1) + ReLU + 2x2/2 maxpool + zero-pad, per channel
    def conv1_body(c, carry):
        acc = jnp.zeros((tb, _B1), jnp.float32)
        for kh in range(3):
            for kw in range(3):
                off = kh * _PW1 + kw
                acc = acc + w1_ref[c, kh * 3 + kw] * xs_ref[:, off:off + _B1]
        y1 = jnp.maximum(acc + b1_ref[c], 0.0)
        mm = jnp.maximum(
            jnp.maximum(y1[:, 0:_MM], y1[:, 1:1 + _MM]),
            jnp.maximum(y1[:, _PW1:_PW1 + _MM], y1[:, _PW1 + 1:_PW1 + 1 + _MM]))
        pool_ref[c] = jnp.dot(mm, sel, preferred_element_type=jnp.float32)
        return carry

    lax.fori_loop(0, 8, conv1_body, 0)

    # -- conv2 (8->16, 3x3, pad 1) + ReLU, fused with the fc contraction per channel
    def co_body(co, logits):
        def ci_body(ci, acc):
            a = acc
            for kh in range(3):
                for kw in range(3):
                    off = kh * _PW2 + kw
                    w = w2_ref[co, ci * 9 + kh * 3 + kw]
                    a = a + w * pool_ref[ci, :, off:off + _B2]
            return a

        acc = lax.fori_loop(0, 8, ci_body, jnp.zeros((tb, _B2), jnp.float32))
        y2 = jnp.maximum(acc + b2_ref[co], 0.0)
        return logits + jnp.dot(y2, wfc_ref[co], preferred_element_type=jnp.float32)

    logits = lax.fori_loop(0, 16, co_body, jnp.zeros((tb, _NCLS), jnp.float32))
    logits = logits + bfc_ref[...]

    # -- softmax over the lane-padded class dim (padded classes have -1e30 bias -> prob 0)
    m = jnp.max(logits, axis=-1, keepdims=True)
    e = jnp.exp(logits - m)
    out_ref[...] = (e / jnp.sum(e, axis=-1, keepdims=True)).astype(out_ref.dtype)


# ----------------------------------------------------------------------------
# Wrapper / parameter preparation
# ----------------------------------------------------------------------------
def _round_up(n, m):
    return ((n + m - 1) // m) * m


def _expand_fc_weight(wfc):
    """(10, 3136) torch fc weight (in-index = c*196 + i*14 + j) -> (16, 222, 128)
    band-layout weight: zero rows at band-padding positions, zero cols for padded classes."""
    w = wfc.reshape(10, 16, _HP, _HP)
    w = jnp.transpose(w, (1, 2, 3, 0))                          # (16,14,14,10)
    w = jnp.pad(w, ((0, 0), (0, 0), (0, _PW2 - _HP), (0, 0)))   # (16,14,16,10)
    w = w.reshape(16, _HP * _PW2, 10)[:, :_B2, :]               # (16,222,10)
    w = jnp.pad(w, ((0, 0), (0, 0), (0, _NCLS - 10)))           # (16,222,128)
    return w.astype(jnp.float32)


@jax.jit
def cnnet_forward(x_nchw, params):
    B = x_nchw.shape[0]
    assert x_nchw.shape[1:] == (1, _H, _H)
    x = x_nchw.reshape(B, _H * _H).astype(jnp.float32)

    tb = min(64, _round_up(B, 8))      # batch tile: small enough for v7x's 64 MiB VMEM
    bp = _round_up(B, tb)
    if bp != B:
        x = jnp.pad(x, ((0, bp - B), (0, 0)))

    w1 = params["w1"].reshape(8, 9).astype(jnp.float32)
    b1 = params["b1"].astype(jnp.float32)
    w2 = params["w2"].reshape(16, 72).astype(jnp.float32)
    b2 = params["b2"].astype(jnp.float32)
    wfc = _expand_fc_weight(params["wfc"].astype(jnp.float32))
    bfc = jnp.concatenate(
        [params["bfc"].astype(jnp.float32),
         jnp.full((_NCLS - 10,), -1e30, jnp.float32)]).reshape(1, _NCLS)

    out = pl.pallas_call(
        _cnnet_kernel,
        grid=(bp // tb,),
        in_specs=[
            pl.BlockSpec((tb, _H * _H), lambda i: (i, 0)),            # input tile
            pl.BlockSpec(memory_space=pltpu.MemorySpace.SMEM),        # w1 (8,9)
            pl.BlockSpec(memory_space=pltpu.MemorySpace.SMEM),        # b1 (8,)
            pl.BlockSpec(memory_space=pltpu.MemorySpace.SMEM),        # w2 (16,72)
            pl.BlockSpec(memory_space=pltpu.MemorySpace.SMEM),        # b2 (16,)
            pl.BlockSpec((16, _B2, _NCLS), lambda i: (0, 0, 0)),      # expanded fc weight
            pl.BlockSpec((1, _NCLS), lambda i: (0, 0)),               # padded fc bias
        ],
        out_specs=pl.BlockSpec((tb, _NCLS), lambda i: (i, 0)),
        out_shape=jax.ShapeDtypeStruct((bp, _NCLS), jnp.float32),
        scratch_shapes=[
            pltpu.VMEM((tb, _PW1 * _PW1), jnp.float32),   # padded input band (tb, 900)
            pltpu.VMEM((8, tb, _PP), jnp.float32),        # zero-padded pooled maps
        ],
        compiler_params=pltpu.CompilerParams(
            dimension_semantics=("parallel",),
            vmem_limit_bytes=32 * 1024 * 1024,
        ),
    )(x, w1, b1, w2, b2, wfc, bfc)

    return out[:B, :10]


# ----------------------------------------------------------------------------
# Pure-JAX reference (for in-script correctness check)
# ----------------------------------------------------------------------------
def cnnet_reference(x_nchw, params):
    x = x_nchw.astype(jnp.float32)
    y = lax.conv_general_dilated(
        x, params["w1"], window_strides=(1, 1), padding=((1, 1), (1, 1)),
        dimension_numbers=("NCHW", "OIHW", "NCHW"))
    y = jnp.maximum(y + params["b1"][None, :, None, None], 0.0)
    y = lax.reduce_window(y, -jnp.inf, lax.max,
                          window_dimensions=(1, 1, 2, 2),
                          window_strides=(1, 1, 2, 2), padding="VALID")
    y = lax.conv_general_dilated(
        y, params["w2"], window_strides=(1, 1), padding=((1, 1), (1, 1)),
        dimension_numbers=("NCHW", "OIHW", "NCHW"))
    y = jnp.maximum(y + params["b2"][None, :, None, None], 0.0)
    flat = y.reshape(y.shape[0], -1)
    logits = flat @ params["wfc"].T + params["bfc"]
    return jax.nn.softmax(logits, axis=-1)


# ----------------------------------------------------------------------------
# Deterministic parameter init (shapes from CNNet.__init__)
# ----------------------------------------------------------------------------
def init_params(key, in_channels=1, out_channels=10):
    k1, k2, k3, k4, k5, k6 = jax.random.split(key, 6)
    return {
        "w1": 0.1 * jax.random.normal(k1, (8, in_channels, 3, 3), jnp.float32),
        "b1": 0.01 * jax.random.normal(k2, (8,), jnp.float32),
        "w2": 0.05 * jax.random.normal(k3, (16, 8, 3, 3), jnp.float32),
        "b2": 0.01 * jax.random.normal(k4, (16,), jnp.float32),
        "wfc": 0.02 * jax.random.normal(k5, (out_channels, 16 * _HP * _HP), jnp.float32),
        "bfc": 0.01 * jax.random.normal(k6, (out_channels,), jnp.float32),
    }


if __name__ == "__main__":
    key = jax.random.PRNGKey(0)
    kx, kp = jax.random.split(key)

    # spatial size must be 28x28 so that fc1 sees 16*14*14 features
    x = jax.random.normal(kx, (2, 1, 28, 28), jnp.float32)
    params = init_params(kp)

    out = jax.block_until_ready(cnnet_forward(x, params))
    ref = jax.block_until_ready(cnnet_reference(x, params))

    assert out.shape == (2, 10)
    assert bool(jnp.allclose(jnp.sum(out, axis=1), 1.0, atol=1e-5))
    assert bool(jnp.allclose(out, ref, atol=2e-3, rtol=0.0))
    print("KERNEL_OK")
</pallas_src>

<mosaic_0001>
module attributes {stable_mosaic.version = 11 : i64} {
  func.func @_cnnet_kernel(%arg0: i32, %arg1: memref<8x784xf32, #tpu.memory_space<vmem>>, %arg2: memref<8x9xf32, #tpu.memory_space<smem>>, %arg3: memref<8xf32, #tpu.memory_space<smem>>, %arg4: memref<16x72xf32, #tpu.memory_space<smem>>, %arg5: memref<16xf32, #tpu.memory_space<smem>>, %arg6: memref<16x222x128xf32, #tpu.memory_space<vmem>>, %arg7: memref<1x128xf32, #tpu.memory_space<vmem>>, %arg8: memref<8x128xf32, #tpu.memory_space<vmem>>, %arg9: memref<8x900xf32, #tpu.memory_space<vmem>>, %arg10: memref<8x8x256xf32, #tpu.memory_space<vmem>>) attributes {dimension_semantics = [#tpu.dimension_semantics<parallel>], iteration_bounds = array<i64: 1>, scalar_prefetch = 0 : i64, scratch_operands = 2 : i64, tpu.core_type = #tpu.core_type<tc>, window_params = [{transform_indices = @transform_0, window_bounds = array<i64: 8, 784>}, {transform_indices = @transform_1, window_bounds = array<i64: 8, 9>}, {transform_indices = @transform_2, window_bounds = array<i64: 8>}, {transform_indices = @transform_3, window_bounds = array<i64: 16, 72>}, {transform_indices = @transform_4, window_bounds = array<i64: 16>}, {pipeline_mode = #tpu.pipeline_mode<synchronous>, transform_indices = @transform_5, window_bounds = array<i64: 16, 222, 128>}, {pipeline_mode = #tpu.pipeline_mode<synchronous>, transform_indices = @transform_6, window_bounds = array<i64: 1, 128>}, {transform_indices = @transform_7, window_bounds = array<i64: 8, 128>}]} {
    %cst = arith.constant 0.000000e+00 : f32
    %0 = vector.broadcast %cst : f32 to vector<8x900xf32>
    %c0 = arith.constant 0 : index
    %c0_0 = arith.constant 0 : index
    %1 = vector.load %arg9[%c0, %c0_0] : memref<8x900xf32, #tpu.memory_space<vmem>>, vector<8x900xf32>
    tpu.vector_store %arg9[%c0, %c0_0], %0 {strides = array<i32>} : memref<8x900xf32, #tpu.memory_space<vmem>>, vector<8x900xf32>,
    %c0_1 = arith.constant 0 : index
    %c0_2 = arith.constant 0 : index
    %2 = vector.load %arg1[%c0_1, %c0_2] : memref<8x784xf32, #tpu.memory_space<vmem>>, vector<8x28xf32>
    %c0_3 = arith.constant 0 : index
    %c31 = arith.constant 31 : index
    %3 = vector.load %arg9[%c0_3, %c31] : memref<8x900xf32, #tpu.memory_space<vmem>>, vector<8x28xf32>
    tpu.vector_store %arg9[%c0_3, %c31], %2 {strides = array<i32>} : memref<8x900xf32, #tpu.memory_space<vmem>>, vector<8x28xf32>,
    %c0_4 = arith.constant 0 : index
    %c28 = arith.constant 28 : index
    %4 = vector.load %arg1[%c0_4, %c28] : memref<8x784xf32, #tpu.memory_space<vmem>>, vector<8x28xf32>
    %c0_5 = arith.constant 0 : index
    %c61 = arith.constant 61 : index
    %5 = vector.load %arg9[%c0_5, %c61] : memref<8x900xf32, #tpu.memory_space<vmem>>, vector<8x28xf32>
    tpu.vector_store %arg9[%c0_5, %c61], %4 {strides = array<i32>} : memref<8x900xf32, #tpu.memory_space<vmem>>, vector<8x28xf32>,
    %c0_6 = arith.constant 0 : index
    %c56 = arith.constant 56 : index
    %6 = vector.load %arg1[%c0_6, %c56] : memref<8x784xf32, #tpu.memory_space<vmem>>, vector<8x28xf32>
    %c0_7 = arith.constant 0 : index
    %c91 = arith.constant 91 : index
    %7 = vector.load %arg9[%c0_7, %c91] : memref<8x900xf32, #tpu.memory_space<vmem>>, vector<8x28xf32>
    tpu.vector_store %arg9[%c0_7, %c91], %6 {strides = array<i32>} : memref<8x900xf32, #tpu.memory_space<vmem>>, vector<8x28xf32>,
    %c0_8 = arith.constant 0 : index
    %c84 = arith.constant 84 : index
    %8 = vector.load %arg1[%c0_8, %c84] : memref<8x784xf32, #tpu.memory_space<vmem>>, vector<8x28xf32>
    %c0_9 = arith.constant 0 : index
    %c121 = arith.constant 121 : index
    %9 = vector.load %arg9[%c0_9, %c121] : memref<8x900xf32, #tpu.memory_space<vmem>>, vector<8x28xf32>
    tpu.vector_store %arg9[%c0_9, %c121], %8 {strides = array<i32>} : memref<8x900xf32, #tpu.memory_space<vmem>>, vector<8x28xf32>,
    %c0_10 = arith.constant 0 : index
    %c112 = arith.constant 112 : index
    %10 = vector.load %arg1[%c0_10, %c112] : memref<8x784xf32, #tpu.memory_space<vmem>>, vector<8x28xf32>
    %c0_11 = arith.constant 0 : index
    %c151 = arith.constant 151 : index
    %11 = vector.load %arg9[%c0_11, %c151] : memref<8x900xf32, #tpu.memory_space<vmem>>, vector<8x28xf32>
    tpu.vector_store %arg9[%c0_11, %c151], %10 {strides = array<i32>} : memref<8x900xf32, #tpu.memory_space<vmem>>, vector<8x28xf32>,
    %c0_12 = arith.constant 0 : index
    %c140 = arith.constant 140 : index
    %12 = vector.load %arg1[%c0_12, %c140] : memref<8x784xf32, #tpu.memory_space<vmem>>, vector<8x28xf32>
    %c0_13 = arith.constant 0 : index
    %c181 = arith.constant 181 : index
    %13 = vector.load %arg9[%c0_13, %c181] : memref<8x900xf32, #tpu.memory_space<vmem>>, vector<8x28xf32>
    tpu.vector_store %arg9[%c0_13, %c181], %12 {strides = array<i32>} : memref<8x900xf32, #tpu.memory_space<vmem>>, vector<8x28xf32>,
    %c0_14 = arith.constant 0 : index
    %c168 = arith.constant 168 : index
    %14 = vector.load %arg1[%c0_14, %c168] : memref<8x784xf32, #tpu.memory_space<vmem>>, vector<8x28xf32>
    %c0_15 = arith.constant 0 : index
    %c211 = arith.constant 211 : index
    %15 = vector.load %arg9[%c0_15, %c211] : memref<8x900xf32, #tpu.memory_space<vmem>>, vector<8x28xf32>
    tpu.vector_store %arg9[%c0_15, %c211], %14 {strides = array<i32>} : memref<8x900xf32, #tpu.memory_space<vmem>>, vector<8x28xf32>,
    %c0_16 = arith.constant 0 : index
    %c196 = arith.constant 196 : index
    %16 = vector.load %arg1[%c0_16, %c196] : memref<8x784xf32, #tpu.memory_space<vmem>>, vector<8x28xf32>
    %c0_17 = arith.constant 0 : index
    %c241 = arith.constant 241 : index
    %17 = vector.load %arg9[%c0_17, %c241] : memref<8x900xf32, #tpu.memory_space<vmem>>, vector<8x28xf32>
    tpu.vector_store %arg9[%c0_17, %c241], %16 {strides = array<i32>} : memref<8x900xf32, #tpu.memory_space<vmem>>, vector<8x28xf32>,
    %c0_18 = arith.constant 0 : index
    %c224 = arith.constant 224 : index
    %18 = vector.load %arg1[%c0_18, %c224] : memref<8x784xf32, #tpu.memory_space<vmem>>, vector<8x28xf32>
    %c0_19 = arith.constant 0 : index
    %c271 = arith.constant 271 : index
    %19 = vector.load %arg9[%c0_19, %c271] : memref<8x900xf32, #tpu.memory_space<vmem>>, vector<8x28xf32>
    tpu.vector_store %arg9[%c0_19, %c271], %18 {strides = array<i32>} : memref<8x900xf32, #tpu.memory_space<vmem>>, vector<8x28xf32>,
    %c0_20 = arith.constant 0 : index
    %c252 = arith.constant 252 : index
    %20 = vector.load %arg1[%c0_20, %c252] : memref<8x784xf32, #tpu.memory_space<vmem>>, vector<8x28xf32>
    %c0_21 = arith.constant 0 : index
    %c301 = arith.constant 301 : index
    %21 = vector.load %arg9[%c0_21, %c301] : memref<8x900xf32, #tpu.memory_space<vmem>>, vector<8x28xf32>
    tpu.vector_store %arg9[%c0_21, %c301], %20 {strides = array<i32>} : memref<8x900xf32, #tpu.memory_space<vmem>>, vector<8x28xf32>,
    %c0_22 = arith.constant 0 : index
    %c280 = arith.constant 280 : index
    %22 = vector.load %arg1[%c0_22, %c280] : memref<8x784xf32, #tpu.memory_space<vmem>>, vector<8x28xf32>
    %c0_23 = arith.constant 0 : index
    %c331 = arith.constant 331 : index
    %23 = vector.load %arg9[%c0_23, %c331] : memref<8x900xf32, #tpu.memory_space<vmem>>, vector<8x28xf32>
    tpu.vector_store %arg9[%c0_23, %c331], %22 {strides = array<i32>} : memref<8x900xf32, #tpu.memory_space<vmem>>, vector<8x28xf32>,
    %c0_24 = arith.constant 0 : index
    %c308 = arith.constant 308 : index
    %24 = vector.load %arg1[%c0_24, %c308] : memref<8x784xf32, #tpu.memory_space<vmem>>, vector<8x28xf32>
    %c0_25 = arith.constant 0 : index
    %c361 = arith.constant 361 : index
    %25 = vector.load %arg9[%c0_25, %c361] : memref<8x900xf32, #tpu.memory_space<vmem>>, vector<8x28xf32>
    tpu.vector_store %arg9[%c0_25, %c361], %24 {strides = array<i32>} : memref<8x900xf32, #tpu.memory_space<vmem>>, vector<8x28xf32>,
    %c0_26 = arith.constant 0 : index
    %c336 = arith.constant 336 : index
    %26 = vector.load %arg1[%c0_26, %c336] : memref<8x784xf32, #tpu.memory_space<vmem>>, vector<8x28xf32>
    %c0_27 = arith.constant 0 : index
    %c391 = arith.constant 391 : index
    %27 = vector.load %arg9[%c0_27, %c391] : memref<8x900xf32, #tpu.memory_space<vmem>>, vector<8x28xf32>
    tpu.vector_store %arg9[%c0_27, %c391], %26 {strides = array<i32>} : memref<8x900xf32, #tpu.memory_space<vmem>>, vector<8x28xf32>,
    %c0_28 = arith.constant 0 : index
    %c364 = arith.constant 364 : index
    %28 = vector.load %arg1[%c0_28, %c364] : memref<8x784xf32, #tpu.memory_space<vmem>>, vector<8x28xf32>
    %c0_29 = arith.constant 0 : index
    %c421 = arith.constant 421 : index
    %29 = vector.load %arg9[%c0_29, %c421] : memref<8x900xf32, #tpu.memory_space<vmem>>, vector<8x28xf32>
    tpu.vector_store %arg9[%c0_29, %c421], %28 {strides = array<i32>} : memref<8x900xf32, #tpu.memory_space<vmem>>, vector<8x28xf32>,
    %c0_30 = arith.constant 0 : index
    %c392 = arith.constant 392 : index
    %30 = vector.load %arg1[%c0_30, %c392] : memref<8x784xf32, #tpu.memory_space<vmem>>, vector<8x28xf32>
    %c0_31 = arith.constant 0 : index
    %c451 = arith.constant 451 : index
    %31 = vector.load %arg9[%c0_31, %c451] : memref<8x900xf32, #tpu.memory_space<vmem>>, vector<8x28xf32>
    tpu.vector_store %arg9[%c0_31, %c451], %30 {strides = array<i32>} : memref<8x900xf32, #tpu.memory_space<vmem>>, vector<8x28xf32>,
    %c0_32 = arith.constant 0 : index
    %c420 = arith.constant 420 : index
    %32 = vector.load %arg1[%c0_32, %c420] : memref<8x784xf32, #tpu.memory_space<vmem>>, vector<8x28xf32>
    %c0_33 = arith.constant 0 : index
    %c481 = arith.constant 481 : index
    %33 = vector.load %arg9[%c0_33, %c481] : memref<8x900xf32, #tpu.memory_space<vmem>>, vector<8x28xf32>
    tpu.vector_store %arg9[%c0_33, %c481], %32 {strides = array<i32>} : memref<8x900xf32, #tpu.memory_space<vmem>>, vector<8x28xf32>,
    %c0_34 = arith.constant 0 : index
    %c448 = arith.constant 448 : index
    %34 = vector.load %arg1[%c0_34, %c448] : memref<8x784xf32, #tpu.memory_space<vmem>>, vector<8x28xf32>
    %c0_35 = arith.constant 0 : index
    %c511 = arith.constant 511 : index
    %35 = vector.load %arg9[%c0_35, %c511] : memref<8x900xf32, #tpu.memory_space<vmem>>, vector<8x28xf32>
    tpu.vector_store %arg9[%c0_35, %c511], %34 {strides = array<i32>} : memref<8x900xf32, #tpu.memory_space<vmem>>, vector<8x28xf32>,
    %c0_36 = arith.constant 0 : index
    %c476 = arith.constant 476 : index
    %36 = vector.load %arg1[%c0_36, %c476] : memref<8x784xf32, #tpu.memory_space<vmem>>, vector<8x28xf32>
    %c0_37 = arith.constant 0 : index
    %c541 = arith.constant 541 : index
    %37 = vector.load %arg9[%c0_37, %c541] : memref<8x900xf32, #tpu.memory_space<vmem>>, vector<8x28xf32>
    tpu.vector_store %arg9[%c0_37, %c541], %36 {strides = array<i32>} : memref<8x900xf32, #tpu.memory_space<vmem>>, vector<8x28xf32>,
    %c0_38 = arith.constant 0 : index
    %c504 = arith.constant 504 : index
    %38 = vector.load %arg1[%c0_38, %c504] : memref<8x784xf32, #tpu.memory_space<vmem>>, vector<8x28xf32>
    %c0_39 = arith.constant 0 : index
    %c571 = arith.constant 571 : index
    %39 = vector.load %arg9[%c0_39, %c571] : memref<8x900xf32, #tpu.memory_space<vmem>>, vector<8x28xf32>
    tpu.vector_store %arg9[%c0_39, %c571], %38 {strides = array<i32>} : memref<8x900xf32, #tpu.memory_space<vmem>>, vector<8x28xf32>,
    %c0_40 = arith.constant 0 : index
    %c532 = arith.constant 532 : index
    %40 = vector.load %arg1[%c0_40, %c532] : memref<8x784xf32, #tpu.memory_space<vmem>>, vector<8x28xf32>
    %c0_41 = arith.constant 0 : index
    %c601 = arith.constant 601 : index
    %41 = vector.load %arg9[%c0_41, %c601] : memref<8x900xf32, #tpu.memory_space<vmem>>, vector<8x28xf32>
    tpu.vector_store %arg9[%c0_41, %c601], %40 {strides = array<i32>} : memref<8x900xf32, #tpu.memory_space<vmem>>, vector<8x28xf32>,
    %c0_42 = arith.constant 0 : index
    %c560 = arith.constant 560 : index
    %42 = vector.load %arg1[%c0_42, %c560] : memref<8x784xf32, #tpu.memory_space<vmem>>, vector<8x28xf32>
    %c0_43 = arith.constant 0 : index
    %c631 = arith.constant 631 : index
    %43 = vector.load %arg9[%c0_43, %c631] : memref<8x900xf32, #tpu.memory_space<vmem>>, vector<8x28xf32>
    tpu.vector_store %arg9[%c0_43, %c631], %42 {strides = array<i32>} : memref<8x900xf32, #tpu.memory_space<vmem>>, vector<8x28xf32>,
    %c0_44 = arith.constant 0 : index
    %c588 = arith.constant 588 : index
    %44 = vector.load %arg1[%c0_44, %c588] : memref<8x784xf32, #tpu.memory_space<vmem>>, vector<8x28xf32>
    %c0_45 = arith.constant 0 : index
    %c661 = arith.constant 661 : index
    %45 = vector.load %arg9[%c0_45, %c661] : memref<8x900xf32, #tpu.memory_space<vmem>>, vector<8x28xf32>
    tpu.vector_store %arg9[%c0_45, %c661], %44 {strides = array<i32>} : memref<8x900xf32, #tpu.memory_space<vmem>>, vector<8x28xf32>,
    %c0_46 = arith.constant 0 : index
    %c616 = arith.constant 616 : index
    %46 = vector.load %arg1[%c0_46, %c616] : memref<8x784xf32, #tpu.memory_space<vmem>>, vector<8x28xf32>
    %c0_47 = arith.constant 0 : index
    %c691 = arith.constant 691 : index
    %47 = vector.load %arg9[%c0_47, %c691] : memref<8x900xf32, #tpu.memory_space<vmem>>, vector<8x28xf32>
    tpu.vector_store %arg9[%c0_47, %c691], %46 {strides = array<i32>} : memref<8x900xf32, #tpu.memory_space<vmem>>, vector<8x28xf32>,
    %c0_48 = arith.constant 0 : index
    %c644 = arith.constant 644 : index
    %48 = vector.load %arg1[%c0_48, %c644] : memref<8x784xf32, #tpu.memory_space<vmem>>, vector<8x28xf32>
    %c0_49 = arith.constant 0 : index
    %c721 = arith.constant 721 : index
    %49 = vector.load %arg9[%c0_49, %c721] : memref<8x900xf32, #tpu.memory_space<vmem>>, vector<8x28xf32>
    tpu.vector_store %arg9[%c0_49, %c721], %48 {strides = array<i32>} : memref<8x900xf32, #tpu.memory_space<vmem>>, vector<8x28xf32>,
    %c0_50 = arith.constant 0 : index
    %c672 = arith.constant 672 : index
    %50 = vector.load %arg1[%c0_50, %c672] : memref<8x784xf32, #tpu.memory_space<vmem>>, vector<8x28xf32>
    %c0_51 = arith.constant 0 : index
    %c751 = arith.constant 751 : index
    %51 = vector.load %arg9[%c0_51, %c751] : memref<8x900xf32, #tpu.memory_space<vmem>>, vector<8x28xf32>
    tpu.vector_store %arg9[%c0_51, %c751], %50 {strides = array<i32>} : memref<8x900xf32, #tpu.memory_space<vmem>>, vector<8x28xf32>,
    %c0_52 = arith.constant 0 : index
    %c700 = arith.constant 700 : index
    %52 = vector.load %arg1[%c0_52, %c700] : memref<8x784xf32, #tpu.memory_space<vmem>>, vector<8x28xf32>
    %c0_53 = arith.constant 0 : index
    %c781 = arith.constant 781 : index
    %53 = vector.load %arg9[%c0_53, %c781] : memref<8x900xf32, #tpu.memory_space<vmem>>, vector<8x28xf32>
    tpu.vector_store %arg9[%c0_53, %c781], %52 {strides = array<i32>} : memref<8x900xf32, #tpu.memory_space<vmem>>, vector<8x28xf32>,
    %c0_54 = arith.constant 0 : index
    %c728 = arith.constant 728 : index
    %54 = vector.load %arg1[%c0_54, %c728] : memref<8x784xf32, #tpu.memory_space<vmem>>, vector<8x28xf32>
    %c0_55 = arith.constant 0 : index
    %c811 = arith.constant 811 : index
    %55 = vector.load %arg9[%c0_55, %c811] : memref<8x900xf32, #tpu.memory_space<vmem>>, vector<8x28xf32>
    tpu.vector_store %arg9[%c0_55, %c811], %54 {strides = array<i32>} : memref<8x900xf32, #tpu.memory_space<vmem>>, vector<8x28xf32>,
    %c0_56 = arith.constant 0 : index
    %c756 = arith.constant 756 : index
    %56 = vector.load %arg1[%c0_56, %c756] : memref<8x784xf32, #tpu.memory_space<vmem>>, vector<8x28xf32>
    %c0_57 = arith.constant 0 : index
    %c841 = arith.constant 841 : index
    %57 = vector.load %arg9[%c0_57, %c841] : memref<8x900xf32, #tpu.memory_space<vmem>>, vector<8x28xf32>
    tpu.vector_store %arg9[%c0_57, %c841], %56 {strides = array<i32>} : memref<8x900xf32, #tpu.memory_space<vmem>>, vector<8x28xf32>,
    %58 = tpu.iota {dimensions = array<i32: 0>} : vector<807x256xi32>
    %59 = tpu.iota {dimensions = array<i32: 1>} : vector<807x256xi32>
    %c17_i32 = arith.constant 17 : i32
    %60 = vector.broadcast %c17_i32 : i32 to vector<807x256xi32>
    %61 = arith.subi %59, %60 : vector<807x256xi32>
    %c4_i32 = arith.constant 4 : i32
    %62 = vector.broadcast %c4_i32 : i32 to vector<807x256xi32>
    %63 = arith.shrsi %61, %62 : vector<807x256xi32>
    %c15_i32 = arith.constant 15 : i32
    %64 = vector.broadcast %c15_i32 : i32 to vector<807x256xi32>
    %65 = arith.andi %61, %64 : vector<807x256xi32>
    %c0_i32 = arith.constant 0 : i32
    %66 = vector.broadcast %c0_i32 : i32 to vector<807x256xi32>
    %67 = arith.cmpi sge, %61, %66 : vector<807x256xi32>
    %c14_i32 = arith.constant 14 : i32
    %68 = vector.broadcast %c14_i32 : i32 to vector<807x256xi32>
    %69 = arith.cmpi slt, %63, %68 : vector<807x256xi32>
    %70 = arith.andi %67, %69 : vector<807x256xi1>
    %c14_i32_58 = arith.constant 14 : i32
    %71 = vector.broadcast %c14_i32_58 : i32 to vector<807x256xi32>
    %72 = arith.cmpi slt, %65, %71 : vector<807x256xi32>
    %73 = arith.andi %70, %72 : vector<807x256xi1>
    %c60_i32 = arith.constant 60 : i32
    %74 = vector.broadcast %c60_i32 : i32 to vector<807x256xi32>
    %75 = arith.muli %63, %74 : vector<807x256xi32>
    %c2_i32 = arith.constant 2 : i32
    %76 = vector.broadcast %c2_i32 : i32 to vector<807x256xi32>
    %77 = arith.muli %65, %76 : vector<807x256xi32>
    %78 = arith.addi %75, %77 : vector<807x256xi32>
    %79 = arith.cmpi eq, %58, %78 : vector<807x256xi32>
    %80 = arith.andi %73, %79 : vector<807x256xi1>
    %cst_59 = arith.constant 1.000000e+00 : f32
    %cst_60 = arith.constant 0.000000e+00 : f32
    %81 = vector.broadcast %cst_59 : f32 to vector<807x256xf32>
    %82 = vector.broadcast %cst_60 : f32 to vector<807x256xf32>
    %83 = arith.select %80, %81, %82 : vector<807x256xi1>, vector<807x256xf32>
    %c0_i32_61 = arith.constant 0 : i32
    %c8_i32 = arith.constant 8 : i32
    %84 = arith.addi %c0_i32_61, %c8_i32 : i32
    %c1_i32 = arith.constant 1 : i32
    scf.for %arg11 = %c0_i32_61 to %84 step %c1_i32  : i32 {
      %cst_73 = arith.constant 0.000000e+00 : f32
      %101 = vector.broadcast %cst_73 : f32 to vector<8x838xf32>
      %102 = arith.index_cast %arg11 : i32 to index
      %c0_74 = arith.constant 0 : index
      %103 = memref.load %arg2[%102, %c0_74] : memref<8x9xf32, #tpu.memory_space<smem>>
      %c0_75 = arith.constant 0 : index
      %c0_76 = arith.constant 0 : index
      %104 = vector.load %arg9[%c0_75, %c0_76] : memref<8x900xf32, #tpu.memory_space<vmem>>, vector<8x838xf32>
      %105 = vector.broadcast %103 : f32 to vector<8x838xf32>
      %106 = arith.mulf %105, %104 : vector<8x838xf32>
      %107 = arith.addf %101, %106 : vector<8x838xf32>
      %108 = arith.index_cast %arg11 : i32 to index
      %c1 = arith.constant 1 : index
      %109 = memref.load %arg2[%108, %c1] : memref<8x9xf32, #tpu.memory_space<smem>>
      %c0_77 = arith.constant 0 : index
      %c1_78 = arith.constant 1 : index
      %110 = vector.load %arg9[%c0_77, %c1_78] : memref<8x900xf32, #tpu.memory_space<vmem>>, vector<8x838xf32>
      %111 = vector.broadcast %109 : f32 to vector<8x838xf32>
      %112 = arith.mulf %111, %110 : vector<8x838xf32>
      %113 = arith.addf %107, %112 : vector<8x838xf32>
      %114 = arith.index_cast %arg11 : i32 to index
      %c2 = arith.constant 2 : index
      %115 = memref.load %arg2[%114, %c2] : memref<8x9xf32, #tpu.memory_space<smem>>
      %c0_79 = arith.constant 0 : index
      %c2_80 = arith.constant 2 : index
      %116 = vector.load %arg9[%c0_79, %c2_80] : memref<8x900xf32, #tpu.memory_space<vmem>>, vector<8x838xf32>
      %117 = vector.broadcast %115 : f32 to vector<8x838xf32>
      %118 = arith.mulf %117, %116 : vector<8x838xf32>
      %119 = arith.addf %113, %118 : vector<8x838xf32>
      %120 = arith.index_cast %arg11 : i32 to index
      %c3 = arith.constant 3 : index
      %121 = memref.load %arg2[%120, %c3] : memref<8x9xf32, #tpu.memory_space<smem>>
      %c0_81 = arith.constant 0 : index
      %c30 = arith.constant 30 : index
      %122 = vector.load %arg9[%c0_81, %c30] : memref<8x900xf32, #tpu.memory_space<vmem>>, vector<8x838xf32>
      %123 = vector.broadcast %121 : f32 to vector<8x838xf32>
      %124 = arith.mulf %123, %122 : vector<8x838xf32>
      %125 = arith.addf %119, %124 : vector<8x838xf32>
      %126 = arith.index_cast %arg11 : i32 to index
      %c4 = arith.constant 4 : index
      %127 = memref.load %arg2[%126, %c4] : memref<8x9xf32, #tpu.memory_space<smem>>
      %c0_82 = arith.constant 0 : index
      %c31_83 = arith.constant 31 : index
      %128 = vector.load %arg9[%c0_82, %c31_83] : memref<8x900xf32, #tpu.memory_space<vmem>>, vector<8x838xf32>
      %129 = vector.broadcast %127 : f32 to vector<8x838xf32>
      %130 = arith.mulf %129, %128 : vector<8x838xf32>
      %131 = arith.addf %125, %130 : vector<8x838xf32>
      %132 = arith.index_cast %arg11 : i32 to index
      %c5 = arith.constant 5 : index
      %133 = memref.load %arg2[%132, %c5] : memref<8x9xf32, #tpu.memory_space<smem>>
      %c0_84 = arith.constant 0 : index
      %c32 = arith.constant 32 : index
      %134 = vector.load %arg9[%c0_84, %c32] : memref<8x900xf32, #tpu.memory_space<vmem>>, vector<8x838xf32>
      %135 = vector.broadcast %133 : f32 to vector<8x838xf32>
      %136 = arith.mulf %135, %134 : vector<8x838xf32>
      %137 = arith.addf %131, %136 : vector<8x838xf32>
      %138 = arith.index_cast %arg11 : i32 to index
      %c6 = arith.constant 6 : index
      %139 = memref.load %arg2[%138, %c6] : memref<8x9xf32, #tpu.memory_space<smem>>
      %c0_85 = arith.constant 0 : index
      %c60 = arith.constant 60 : index
      %140 = vector.load %arg9[%c0_85, %c60] : memref<8x900xf32, #tpu.memory_space<vmem>>, vector<8x838xf32>
      %141 = vector.broadcast %139 : f32 to vector<8x838xf32>
      %142 = arith.mulf %141, %140 : vector<8x838xf32>
      %143 = arith.addf %137, %142 : vector<8x838xf32>
      %144 = arith.index_cast %arg11 : i32 to index
      %c7 = arith.constant 7 : index
      %145 = memref.load %arg2[%144, %c7] : memref<8x9xf32, #tpu.memory_space<smem>>
      %c0_86 = arith.constant 0 : index
      %c61_87 = arith.constant 61 : index
      %146 = vector.load %arg9[%c0_86, %c61_87] : memref<8x900xf32, #tpu.memory_space<vmem>>, vector<8x838xf32>
      %147 = vector.broadcast %145 : f32 to vector<8x838xf32>
      %148 = arith.mulf %147, %146 : vector<8x838xf32>
      %149 = arith.addf %143, %148 : vector<8x838xf32>
      %150 = arith.index_cast %arg11 : i32 to index
      %c8 = arith.constant 8 : index
      %151 = memref.load %arg2[%150, %c8] : memref<8x9xf32, #tpu.memory_space<smem>>
      %c0_88 = arith.constant 0 : index
      %c62 = arith.constant 62 : index
      %152 = vector.load %arg9[%c0_88, %c62] : memref<8x900xf32, #tpu.memory_space<vmem>>, vector<8x838xf32>
      %153 = vector.broadcast %151 : f32 to vector<8x838xf32>
      %154 = arith.mulf %153, %152 : vector<8x838xf32>
      %155 = arith.addf %149, %154 : vector<8x838xf32>
      %156 = arith.index_cast %arg11 : i32 to index
      %157 = memref.load %arg3[%156] : memref<8xf32, #tpu.memory_space<smem>>
      %158 = vector.broadcast %157 : f32 to vector<8x838xf32>
      %159 = arith.addf %155, %158 : vector<8x838xf32>
      %cst_89 = arith.constant 0.000000e+00 : f32
      %160 = vector.broadcast %cst_89 : f32 to vector<8x838xf32>
      %161 = arith.maximumf %159, %160 : vector<8x838xf32>
      %162 = vector.extract_strided_slice %161 {offsets = [0, 0], sizes = [8, 807], strides = [1, 1]} : vector<8x838xf32> to vector<8x807xf32>
      %163 = vector.extract_strided_slice %161 {offsets = [0, 1], sizes = [8, 807], strides = [1, 1]} : vector<8x838xf32> to vector<8x807xf32>
      %164 = arith.maximumf %162, %163 : vector<8x807xf32>
      %165 = vector.extract_strided_slice %161 {offsets = [0, 30], sizes = [8, 807], strides = [1, 1]} : vector<8x838xf32> to vector<8x807xf32>
      %166 = vector.extract_strided_slice %161 {offsets = [0, 31], sizes = [8, 807], strides = [1, 1]} : vector<8x838xf32> to vector<8x807xf32>
      %167 = arith.maximumf %165, %166 : vector<8x807xf32>
      %168 = arith.maximumf %164, %167 : vector<8x807xf32>
      %cst_90 = arith.constant dense<0.000000e+00> : vector<8x256xf32>
      %169 = tpu.matmul %168, %83, %cst_90 {dimension_numbers = #tpu.dot_dimension_numbers<[1], [0], [0], [1], [0, 0, 1, 1], [], []>} : vector<8x807xf32>, vector<807x256xf32>, vector<8x256xf32> -> vector<8x256xf32>
      %170 = arith.index_cast %arg11 : i32 to index
      %c0_91 = arith.constant 0 : index
      %c0_92 = arith.constant 0 : index
      %171 = vector.load %arg10[%170, %c0_91, %c0_92] : memref<8x8x256xf32, #tpu.memory_space<vmem>>, vector<1x8x256xf32>
      %172 = vector.shape_cast %171 : vector<1x8x256xf32> to vector<8x256xf32>
      %173 = vector.shape_cast %169 : vector<8x256xf32> to vector<1x8x256xf32>
      tpu.vector_store %arg10[%170, %c0_91, %c0_92], %173 {strides = array<i32>} : memref<8x8x256xf32, #tpu.memory_space<vmem>>, vector<1x8x256xf32>,
    }
    %c8_i32_62 = arith.constant 8 : i32
    %cst_63 = arith.constant 0.000000e+00 : f32
    %85 = vector.broadcast %cst_63 : f32 to vector<8x128xf32>
    %c0_i32_64 = arith.constant 0 : i32
    %c16_i32 = arith.constant 16 : i32
    %86 = arith.addi %c0_i32_64, %c16_i32 : i32
    %c1_i32_65 = arith.constant 1 : i32
    %87 = scf.for %arg11 = %c0_i32_64 to %86 step %c1_i32_65 iter_args(%arg12 = %85) -> (vector<8x128xf32>)  : i32 {
      %cst_73 = arith.constant 0.000000e+00 : f32
      %101 = vector.broadcast %cst_73 : f32 to vector<8x222xf32>
      %c0_i32_74 = arith.constant 0 : i32
      %c8_i32_75 = arith.constant 8 : i32
      %102 = arith.addi %c0_i32_74, %c8_i32_75 : i32
      %c1_i32_76 = arith.constant 1 : i32
      %103 = scf.for %arg13 = %c0_i32_74 to %102 step %c1_i32_76 iter_args(%arg14 = %101) -> (vector<8x222xf32>)  : i32 {
        %c9_i32 = arith.constant 9 : i32
        %115 = arith.muli %arg13, %c9_i32 : i32
        %c0_i32_82 = arith.constant 0 : i32
        %116 = arith.addi %115, %c0_i32_82 : i32
        %c0_i32_83 = arith.constant 0 : i32
        %117 = arith.addi %116, %c0_i32_83 : i32
        %118 = arith.index_cast %arg11 : i32 to index
        %119 = arith.index_cast %117 : i32 to index
        %120 = memref.load %arg4[%118, %119] : memref<16x72xf32, #tpu.memory_space<smem>>
        %121 = arith.index_cast %arg13 : i32 to index
        %c0_84 = arith.constant 0 : index
        %c0_85 = arith.constant 0 : index
        %122 = vector.load %arg10[%121, %c0_84, %c0_85] : memref<8x8x256xf32, #tpu.memory_space<vmem>>, vector<1x8x222xf32>
        %123 = vector.shape_cast %122 : vector<1x8x222xf32> to vector<8x222xf32>
        %124 = vector.broadcast %120 : f32 to vector<8x222xf32>
        %125 = arith.mulf %124, %123 : vector<8x222xf32>
        %126 = arith.addf %arg14, %125 : vector<8x222xf32>
        %c9_i32_86 = arith.constant 9 : i32
        %127 = arith.muli %arg13, %c9_i32_86 : i32
        %c0_i32_87 = arith.constant 0 : i32
        %128 = arith.addi %127, %c0_i32_87 : i32
        %c1_i32_88 = arith.constant 1 : i32
        %129 = arith.addi %128, %c1_i32_88 : i32
        %130 = arith.index_cast %arg11 : i32 to index
        %131 = arith.index_cast %129 : i32 to index
        %132 = memref.load %arg4[%130, %131] : memref<16x72xf32, #tpu.memory_space<smem>>
        %133 = arith.index_cast %arg13 : i32 to index
        %c0_89 = arith.constant 0 : index
        %c1 = arith.constant 1 : index
        %134 = vector.load %arg10[%133, %c0_89, %c1] : memref<8x8x256xf32, #tpu.memory_space<vmem>>, vector<1x8x222xf32>
        %135 = vector.shape_cast %134 : vector<1x8x222xf32> to vector<8x222xf32>
        %136 = vector.broadcast %132 : f32 to vector<8x222xf32>
        %137 = arith.mulf %136, %135 : vector<8x222xf32>
        %138 = arith.addf %126, %137 : vector<8x222xf32>
        %c9_i32_90 = arith.constant 9 : i32
        %139 = arith.muli %arg13, %c9_i32_90 : i32
        %c0_i32_91 = arith.constant 0 : i32
        %140 = arith.addi %139, %c0_i32_91 : i32
        %c2_i32_92 = arith.constant 2 : i32
        %141 = arith.addi %140, %c2_i32_92 : i32
        %142 = arith.index_cast %arg11 : i32 to index
        %143 = arith.index_cast %141 : i32 to index
        %144 = memref.load %arg4[%142, %143] : memref<16x72xf32, #tpu.memory_space<smem>>
        %145 = arith.index_cast %arg13 : i32 to index
        %c0_93 = arith.constant 0 : index
        %c2 = arith.constant 2 : index
        %146 = vector.load %arg10[%145, %c0_93, %c2] : memref<8x8x256xf32, #tpu.memory_space<vmem>>, vector<1x8x222xf32>
        %147 = vector.shape_cast %146 : vector<1x8x222xf32> to vector<8x222xf32>
        %148 = vector.broadcast %144 : f32 to vector<8x222xf32>
        %149 = arith.mulf %148, %147 : vector<8x222xf32>
        %150 = arith.addf %138, %149 : vector<8x222xf32>
        %c9_i32_94 = arith.constant 9 : i32
        %151 = arith.muli %arg13, %c9_i32_94 : i32
        %c3_i32 = arith.constant 3 : i32
        %152 = arith.addi %151, %c3_i32 : i32
        %c0_i32_95 = arith.constant 0 : i32
        %153 = arith.addi %152, %c0_i32_95 : i32
        %154 = arith.index_cast %arg11 : i32 to index
        %155 = arith.index_cast %153 : i32 to index
        %156 = memref.load %arg4[%154, %155] : memref<16x72xf32, #tpu.memory_space<smem>>
        %157 = arith.index_cast %arg13 : i32 to index
        %c0_96 = arith.constant 0 : index
        %c16 = arith.constant 16 : index
        %158 = vector.load %arg10[%157, %c0_96, %c16] : memref<8x8x256xf32, #tpu.memory_space<vmem>>, vector<1x8x222xf32>
        %159 = vector.shape_cast %158 : vector<1x8x222xf32> to vector<8x222xf32>
        %160 = vector.broadcast %156 : f32 to vector<8x222xf32>
        %161 = arith.mulf %160, %159 : vector<8x222xf32>
        %162 = arith.addf %150, %161 : vector<8x222xf32>
        %c9_i32_97 = arith.constant 9 : i32
        %163 = arith.muli %arg13, %c9_i32_97 : i32
        %c3_i32_98 = arith.constant 3 : i32
        %164 = arith.addi %163, %c3_i32_98 : i32
        %c1_i32_99 = arith.constant 1 : i32
        %165 = arith.addi %164, %c1_i32_99 : i32
        %166 = arith.index_cast %arg11 : i32 to index
        %167 = arith.index_cast %165 : i32 to index
        %168 = memref.load %arg4[%166, %167] : memref<16x72xf32, #tpu.memory_space<smem>>
        %169 = arith.index_cast %arg13 : i32 to index
        %c0_100 = arith.constant 0 : index
        %c17 = arith.constant 17 : index
        %170 = vector.load %arg10[%169, %c0_100, %c17] : memref<8x8x256xf32, #tpu.memory_space<vmem>>, vector<1x8x222xf32>
        %171 = vector.shape_cast %170 : vector<1x8x222xf32> to vector<8x222xf32>
        %172 = vector.broadcast %168 : f32 to vector<8x222xf32>
        %173 = arith.mulf %172, %171 : vector<8x222xf32>
        %174 = arith.addf %162, %173 : vector<8x222xf32>
        %c9_i32_101 = arith.constant 9 : i32
        %175 = arith.muli %arg13, %c9_i32_101 : i32
        %c3_i32_102 = arith.constant 3 : i32
        %176 = arith.addi %175, %c3_i32_102 : i32
        %c2_i32_103 = arith.constant 2 : i32
        %177 = arith.addi %176, %c2_i32_103 : i32
        %178 = arith.index_cast %arg11 : i32 to index
        %179 = arith.index_cast %177 : i32 to index
        %180 = memref.load %arg4[%178, %179] : memref<16x72xf32, #tpu.memory_space<smem>>
        %181 = arith.index_cast %arg13 : i32 to index
        %c0_104 = arith.constant 0 : index
        %c18 = arith.constant 18 : index
        %182 = vector.load %arg10[%181, %c0_104, %c18] : memref<8x8x256xf32, #tpu.memory_space<vmem>>, vector<1x8x222xf32>
        %183 = vector.shape_cast %182 : vector<1x8x222xf32> to vector<8x222xf32>
        %184 = vector.broadcast %180 : f32 to vector<8x222xf32>
        %185 = arith.mulf %184, %183 : vector<8x222xf32>
        %186 = arith.addf %174, %185 : vector<8x222xf32>
        %c9_i32_105 = arith.constant 9 : i32
        %187 = arith.muli %arg13, %c9_i32_105 : i32
        %c6_i32 = arith.constant 6 : i32
        %188 = arith.addi %187, %c6_i32 : i32
        %c0_i32_106 = arith.constant 0 : i32
        %189 = arith.addi %188, %c0_i32_106 : i32
        %190 = arith.index_cast %arg11 : i32 to index
        %191 = arith.index_cast %189 : i32 to index
        %192 = memref.load %arg4[%190, %191] : memref<16x72xf32, #tpu.memory_space<smem>>
        %193 = arith.index_cast %arg13 : i32 to index
        %c0_107 = arith.constant 0 : index
        %c32 = arith.constant 32 : index
        %194 = vector.load %arg10[%193, %c0_107, %c32] : memref<8x8x256xf32, #tpu.memory_space<vmem>>, vector<1x8x222xf32>
        %195 = vector.shape_cast %194 : vector<1x8x222xf32> to vector<8x222xf32>
        %196 = vector.broadcast %192 : f32 to vector<8x222xf32>
        %197 = arith.mulf %196, %195 : vector<8x222xf32>
        %198 = arith.addf %186, %197 : vector<8x222xf32>
        %c9_i32_108 = arith.constant 9 : i32
        %199 = arith.muli %arg13, %c9_i32_108 : i32
        %c6_i32_109 = arith.constant 6 : i32
        %200 = arith.addi %199, %c6_i32_109 : i32
        %c1_i32_110 = arith.constant 1 : i32
        %201 = arith.addi %200, %c1_i32_110 : i32
        %202 = arith.index_cast %arg11 : i32 to index
        %203 = arith.index_cast %201 : i32 to index
        %204 = memref.load %arg4[%202, %203] : memref<16x72xf32, #tpu.memory_space<smem>>
        %205 = arith.index_cast %arg13 : i32 to index
        %c0_111 = arith.constant 0 : index
        %c33 = arith.constant 33 : index
        %206 = vector.load %arg10[%205, %c0_111, %c33] : memref<8x8x256xf32, #tpu.memory_space<vmem>>, vector<1x8x222xf32>
        %207 = vector.shape_cast %206 : vector<1x8x222xf32> to vector<8x222xf32>
        %208 = vector.broadcast %204 : f32 to vector<8x222xf32>
        %209 = arith.mulf %208, %207 : vector<8x222xf32>
        %210 = arith.addf %198, %209 : vector<8x222xf32>
        %c9_i32_112 = arith.constant 9 : i32
        %211 = arith.muli %arg13, %c9_i32_112 : i32
        %c6_i32_113 = arith.constant 6 : i32
        %212 = arith.addi %211, %c6_i32_113 : i32
        %c2_i32_114 = arith.constant 2 : i32
        %213 = arith.addi %212, %c2_i32_114 : i32
        %214 = arith.index_cast %arg11 : i32 to index
        %215 = arith.index_cast %213 : i32 to index
        %216 = memref.load %arg4[%214, %215] : memref<16x72xf32, #tpu.memory_space<smem>>
        %217 = arith.index_cast %arg13 : i32 to index
        %c0_115 = arith.constant 0 : index
        %c34 = arith.constant 34 : index
        %218 = vector.load %arg10[%217, %c0_115, %c34] : memref<8x8x256xf32, #tpu.memory_space<vmem>>, vector<1x8x222xf32>
        %219 = vector.shape_cast %218 : vector<1x8x222xf32> to vector<8x222xf32>
        %220 = vector.broadcast %216 : f32 to vector<8x222xf32>
        %221 = arith.mulf %220, %219 : vector<8x222xf32>
        %222 = arith.addf %210, %221 : vector<8x222xf32>
        scf.yield %222 : vector<8x222xf32>
      }
      %c8_i32_77 = arith.constant 8 : i32
      %104 = arith.index_cast %arg11 : i32 to index
      %105 = memref.load %arg5[%104] : memref<16xf32, #tpu.memory_space<smem>>
      %106 = vector.broadcast %105 : f32 to vector<8x222xf32>
      %107 = arith.addf %103, %106 : vector<8x222xf32>
      %cst_78 = arith.constant 0.000000e+00 : f32
      %108 = vector.broadcast %cst_78 : f32 to vector<8x222xf32>
      %109 = arith.maximumf %107, %108 : vector<8x222xf32>
      %110 = arith.index_cast %arg11 : i32 to index
      %c0_79 = arith.constant 0 : index
      %c0_80 = arith.constant 0 : index
      %111 = vector.load %arg6[%110, %c0_79, %c0_80] : memref<16x222x128xf32, #tpu.memory_space<vmem>>, vector<1x222x128xf32>
      %112 = vector.shape_cast %111 : vector<1x222x128xf32> to vector<222x128xf32>
      %cst_81 = arith.constant dense<0.000000e+00> : vector<8x128xf32>
      %113 = tpu.matmul %109, %112, %cst_81 {dimension_numbers = #tpu.dot_dimension_numbers<[1], [0], [0], [1], [0, 0, 1, 1], [], []>} : vector<8x222xf32>, vector<222x128xf32>, vector<8x128xf32> -> vector<8x128xf32>
      %114 = arith.addf %arg12, %113 : vector<8x128xf32>
      scf.yield %114 : vector<8x128xf32>
    }
    %c16_i32_66 = arith.constant 16 : i32
    %c0_67 = arith.constant 0 : index
    %c0_68 = arith.constant 0 : index
    %88 = vector.load %arg7[%c0_67, %c0_68] : memref<1x128xf32, #tpu.memory_space<vmem>>, vector<1x128xf32>
    %89 = vector.broadcast %88 : vector<1x128xf32> to vector<8x128xf32>
    %90 = arith.addf %87, %89 : vector<8x128xf32>
    %cst_69 = arith.constant dense<0xFF800000> : vector<8xf32>
    %91 = vector.multi_reduction <maximumf>, %90, %cst_69 [1] : vector<8x128xf32> to vector<8xf32>
    %92 = vector.shape_cast %91 : vector<8xf32> to vector<8x1xf32>
    %93 = vector.broadcast %92 : vector<8x1xf32> to vector<8x128xf32>
    %94 = arith.subf %90, %93 : vector<8x128xf32>
    %95 = math.exp %94 : vector<8x128xf32>
    %cst_70 = arith.constant dense<0.000000e+00> : vector<8xf32>
    %96 = vector.multi_reduction <add>, %95, %cst_70 [1] : vector<8x128xf32> to vector<8xf32>
    %97 = vector.shape_cast %96 : vector<8xf32> to vector<8x1xf32>
    %98 = vector.broadcast %97 : vector<8x1xf32> to vector<8x128xf32>
    %99 = arith.divf %95, %98 : vector<8x128xf32>
    %c0_71 = arith.constant 0 : index
    %c0_72 = arith.constant 0 : index
    %100 = vector.load %arg8[%c0_71, %c0_72] : memref<8x128xf32, #tpu.memory_space<vmem>>, vector<8x128xf32>
    tpu.vector_store %arg8[%c0_71, %c0_72], %99 {strides = array<i32>} : memref<8x128xf32, #tpu.memory_space<vmem>>, vector<8x128xf32>,
    return
  }
  func.func @transform_0(%arg0: i32) -> (i32, i32) {
    %c0_i32 = arith.constant 0 : i32
    %c0_i32_0 = arith.constant 0 : i32
    return %arg0, %c0_i32 : i32, i32
  }
  func.func @transform_1(%arg0: i32) -> (i32, i32) {
    %c0_i32 = arith.constant 0 : i32
    %c0_i32_0 = arith.constant 0 : i32
    %c0_i32_1 = arith.constant 0 : i32
    return %c0_i32, %c0_i32_0 : i32, i32
  }
  func.func @transform_2(%arg0: i32) -> i32 {
    %c0_i32 = arith.constant 0 : i32
    %c0_i32_0 = arith.constant 0 : i32
    return %c0_i32 : i32
  }
  func.func @transform_3(%arg0: i32) -> (i32, i32) {
    %c0_i32 = arith.constant 0 : i32
    %c0_i32_0 = arith.constant 0 : i32
    %c0_i32_1 = arith.constant 0 : i32
    return %c0_i32, %c0_i32_0 : i32, i32
  }
  func.func @transform_4(%arg0: i32) -> i32 {
    %c0_i32 = arith.constant 0 : i32
    %c0_i32_0 = arith.constant 0 : i32
    return %c0_i32 : i32
  }
  func.func @transform_5(%arg0: i32) -> (i32, i32, i32) {
    %c0_i32 = arith.constant 0 : i32
    %c0_i32_0 = arith.constant 0 : i32
    %c0_i32_1 = arith.constant 0 : i32
    %c0_i32_2 = arith.constant 0 : i32
    return %c0_i32, %c0_i32_0, %c0_i32_1 : i32, i32, i32
  }
  func.func @transform_6(%arg0: i32) -> (i32, i32) {
    %c0_i32 = arith.constant 0 : i32
    %c0_i32_0 = arith.constant 0 : i32
    %c0_i32_1 = arith.constant 0 : i32
    return %c0_i32, %c0_i32_0 : i32, i32
  }
  func.func @transform_7(%arg0: i32) -> (i32, i32) {
    %c0_i32 = arith.constant 0 : i32
    %c0_i32_0 = arith.constant 0 : i32
    return %arg0, %c0_i32 : i32, i32
  }
}

</mosaic_0001>

<llo_original>
// kernel: cnnet_forward.1
$region0: #{cnnet_forward.1}
  #allocation0 [shape = 'u32[]', space=smem, size = 0x4, offset = 0x4, fixed_abs, tag = 'smem constant byte address 0x4 - core index']
  #allocation1 [shape = 'u32[144,128]{1,0:T(1,128)}', space=vmem, size = 0x12000, scoped, tag = 'internal scratch']
  #allocation2 [shape = 'f32[8,900]{1,0:T(8,128)}', space=vmem, size = 0x8000, scoped, tag = 'scratch operand']
  #allocation3 [shape = 'f32[8,8,256]{2,1,0:T(8,128)}', space=vmem, size = 0x10000, scoped, tag = 'scratch operand']
  %s0 = inlined_call_operand.vmem [shape: f32[8,784], index: 0, kind: input, shape index: {}]
  %s1 = inlined_call_operand.vmem [shape: f32[8,9], index: 1, kind: input, shape index: {}]
  %s2 = inlined_call_operand.vmem [shape: f32[8], index: 2, kind: input, shape index: {}]
  %s3 = inlined_call_operand.vmem [shape: f32[16,72], index: 3, kind: input, shape index: {}]
  %s4 = inlined_call_operand.vmem [shape: f32[16], index: 4, kind: input, shape index: {}]
  %s5 = inlined_call_operand.vmem [shape: f32[16,222,128], index: 5, kind: input, shape index: {}]
  %s6 = inlined_call_operand.vmem [shape: f32[1,128], index: 6, kind: input, shape index: {}]
  %s7 = inlined_call_operand.vmem [shape: f32[8,128], index: 7, kind: output, shape index: {}]
  %s8 = sld [smem:[#allocation0]]
  $region75: #{cnnet_forward.1} parent=0
    _
  %s10 = ssub.s32 1, %s8
  %s11 = scalar_select 0, %s10, %s8
  $region1: #{cnnet_forward.1} parent=0
    #allocation4 [shape = 'u8[4096]{0}', space=smem, size = 0x1000, scoped, tag = 'input window, operand 1, single buffered']
    #allocation5 [shape = 's32[1]{0}', space=sflag, size = 0x4, scoped, tag = 'scoped memory for cnnet_forward.1']
    #allocation6 [shape = 'u8[512]{0}', space=smem, size = 0x200, scoped, tag = 'input window, operand 2, single buffered']
    #allocation7 [shape = 's32[1]{0}', space=sflag, size = 0x4, scoped, tag = 'scoped memory for cnnet_forward.1']
    #allocation8 [shape = 'u8[8192]{0}', space=smem, size = 0x2000, scoped, tag = 'input window, operand 3, single buffered']
    #allocation9 [shape = 'u8[512]{0}', space=smem, size = 0x200, scoped, tag = 'input window, operand 4, single buffered']
    #allocation10 [shape = 's32[1]{0}', space=sflag, size = 0x4, scoped, tag = 'scoped memory for cnnet_forward.1']
    %12 = vsyncpa [#allocation5], 0
    %13 = vsyncpa [#allocation7], 0
    %14 = vsyncpa [#allocation10], 0
    // Predicated region
    $region2: #{cnnet_forward.1} parent=1 // pred_check
      _
    $region3: #{cnnet_forward.1} parent=1 // pred_check_branch
      %16 = sbr.rel (0) target = $region5
    $region4: #{cnnet_forward.1} parent=1 // pred_region
      _
    $region5: #{cnnet_forward.1} parent=1 // pred_fallthru
      _
    // Predicated region
    $region6: #{cnnet_forward.1} parent=1 // pred_check
      _
    $region7: #{cnnet_forward.1} parent=1 // pred_check_branch
      %18 = sbr.rel (0) target = $region9
    $region8: #{cnnet_forward.1} parent=1 // pred_region
      %s20 = ssub.s32 128, 128
      %21 = vsyncadd [#allocation5], %s20
      %s23 = sshll.u32 %s1, 4
      %s24 = int_to_ptr.vmem [resolvable:$true] %s23
      %26 = dma.vmem_to_smem %s24, 128, [#allocation4], [#allocation5]
    $region9: #{cnnet_forward.1} parent=1 // pred_fallthru
      _
    // Predicated region
    $region10: #{cnnet_forward.1} parent=1 // pred_check
      _
    $region11: #{cnnet_forward.1} parent=1 // pred_check_branch
      %28 = sbr.rel (0) target = $region13
    $region12: #{cnnet_forward.1} parent=1 // pred_region
      %s30 = ssub.s32 16, 16
      %31 = vsyncadd [#allocation7], %s30
      %s33 = sshll.u32 %s2, 4
      %s34 = int_to_ptr.vmem [resolvable:$true] %s33
      %36 = dma.vmem_to_smem %s34, 16, [#allocation6], [#allocation7]
    $region13: #{cnnet_forward.1} parent=1 // pred_fallthru
      _
    // Predicated region
    $region14: #{cnnet_forward.1} parent=1 // pred_check
      _
    $region15: #{cnnet_forward.1} parent=1 // pred_check_branch
      %38 = sbr.rel (0) target = $region17
    $region16: #{cnnet_forward.1} parent=1 // pred_region
      %s40 = ssub.s32 256, 256
      %41 = vsyncadd [#allocation7], %s40
      %s42 = sshll.u32 %s3, 4
      %s43 = int_to_ptr.vmem [resolvable:$true] %s42
      %48 = dma.vmem_to_smem %s43, 256, [#allocation8], [#allocation7], 128, 128, 8
    $region17: #{cnnet_forward.1} parent=1 // pred_fallthru
      _
    // Predicated region
    $region18: #{cnnet_forward.1} parent=1 // pred_check
      _
    $region19: #{cnnet_forward.1} parent=1 // pred_check_branch
      %50 = sbr.rel (0) target = $region21
    $region20: #{cnnet_forward.1} parent=1 // pred_region
      %s52 = ssub.s32 16, 16
      %53 = vsyncadd [#allocation10], %s52
      %s55 = sshll.u32 %s4, 4
      %s56 = int_to_ptr.vmem [resolvable:$true] %s55
      %58 = dma.vmem_to_smem %s56, 16, [#allocation9], [#allocation10]
    $region21: #{cnnet_forward.1} parent=1 // pred_fallthru
      _
    // Predicated region
    $region22: #{cnnet_forward.1} parent=1 // pred_check
      _
    $region23: #{cnnet_forward.1} parent=1 // pred_check_branch
      %60 = sbr.rel (0) target = $region25
    $region24: #{cnnet_forward.1} parent=1 // pred_region
      _
    $region25: #{cnnet_forward.1} parent=1 // pred_fallthru
      _
    // Predicated region
    $region26: #{cnnet_forward.1} parent=1 // pred_check
      _
    $region27: #{cnnet_forward.1} parent=1 // pred_check_branch
      %62 = sbr.rel (0) target = $region29
    $region28: #{cnnet_forward.1} parent=1 // pred_region
      _
    $region29: #{cnnet_forward.1} parent=1 // pred_fallthru
      _
    // Predicated region
    $region30: #{cnnet_forward.1} parent=1 // pred_check
      _
    $region31: #{cnnet_forward.1} parent=1 // pred_check_branch
      %64 = sbr.rel (0) target = $region33
    $region32: #{cnnet_forward.1} parent=1 // pred_region
      %65 = dma.done [#allocation5], 128
    $region33: #{cnnet_forward.1} parent=1 // pred_fallthru
      _
    // Predicated region
    $region34: #{cnnet_forward.1} parent=1 // pred_check
      _
    $region35: #{cnnet_forward.1} parent=1 // pred_check_branch
      %67 = sbr.rel (0) target = $region37
    $region36: #{cnnet_forward.1} parent=1 // pred_region
      %68 = dma.done [#allocation7], 16
    $region37: #{cnnet_forward.1} parent=1 // pred_fallthru
      _
    // Predicated region
    $region38: #{cnnet_forward.1} parent=1 // pred_check
      _
    $region39: #{cnnet_forward.1} parent=1 // pred_check_branch
      %70 = sbr.rel (0) target = $region41
    $region40: #{cnnet_forward.1} parent=1 // pred_region
      %71 = dma.done [#allocation7], 256
    $region41: #{cnnet_forward.1} parent=1 // pred_fallthru
      _
    // Predicated region
    $region42: #{cnnet_forward.1} parent=1 // pred_check
      _
    $region43: #{cnnet_forward.1} parent=1 // pred_check_branch
      %73 = sbr.rel (0) target = $region45
    $region44: #{cnnet_forward.1} parent=1 // pred_region
      %74 = dma.done [#allocation10], 16
    $region45: #{cnnet_forward.1} parent=1 // pred_fallthru
      _
    %75 = sfence
    %76 = vst [vmem:[#allocation2] sm:$0xff] 0.0
    %77 = vst [vmem:[#allocation2 + $0x8] sm:$0xff] 0.0
    %78 = vst [vmem:[#allocation2 + $0x10] sm:$0xff] 0.0
    %79 = vst [vmem:[#allocation2 + $0x18] sm:$0xff] 0.0
    %80 = vst [vmem:[#allocation2 + $0x20] sm:$0xff] 0.0
    %81 = vst [vmem:[#allocation2 + $0x28] sm:$0xff] 0.0
    %82 = vst [vmem:[#allocation2 + $0x30] sm:$0xff] 0.0
    %vm83 = vcmask 31744
    %84 = vst.msk [vmem:[#allocation2 + $0x38] sm:$0xff] %vm83, 0.0
    %v85 = vld [vmem:[%s0] sm:$0xff]
    %87 = vrot.lane.b32.xlu0 %v85, 31
    %v88 = vpop.permute.xlu0 %87
    %vm90 = vcmask 482552
    %91 = vst.msk [vmem:[#allocation2] sm:$0xff] %vm90, %v88
    %v92 = vld [vmem:[%s0] sm:$0xff]
    %94 = vrot.lane.b32.xlu0 %v92, 33
    %v95 = vpop.permute.xlu0 %94
    %vm97 = vcmask 728552
    %98 = vst.msk [vmem:[#allocation2] sm:$0xff] %vm97, %v95
    %v99 = vld [vmem:[%s0] sm:$0xff]
    %101 = vrot.lane.b32.xlu0 %v99, 35
    %v102 = vpop.permute.xlu0 %101
    %vm104 = vcmask 974552
    %105 = vst.msk [vmem:[#allocation2] sm:$0xff] %vm104, %v102
    %v106 = vld [vmem:[%s0] sm:$0xff]
    %108 = vrot.lane.b32.xlu0 %v106, 37
    %v109 = vpop.permute.xlu0 %108
    %vm111 = vcmask 1048520
    %112 = vst.msk [vmem:[#allocation2] sm:$0xff] %vm111, %v109
    %vm113 = vcmask 171008
    %114 = vst.msk [vmem:[#allocation2 + $0x8] sm:$0xff] %vm113, %v109
    %v115 = vld [vmem:[%s0] sm:$0xff]
    %v116 = vld [vmem:[%s0 + $0x8] sm:$0xff]
    %119 = vrot.lane.b32.xlu0 %v115, 39
    %v120 = vpop.permute.xlu0 %119
    %121 = vrot.lane.b32.xlu0 %v116, 39
    %v122 = vpop.permute.xlu0 %121
    %vm123 = vcmask 318464
    %v124 = vsel %vm123, %v120, %v122
    %vm126 = vcmask 416952
    %127 = vst.msk [vmem:[#allocation2 + $0x8] sm:$0xff] %vm126, %v124
    %v128 = vld [vmem:[%s0 + $0x8] sm:$0xff]
    %130 = vrot.lane.b32.xlu0 %v128, 41
    %v131 = vpop.permute.xlu0 %130
    %vm133 = vcmask 662952
    %134 = vst.msk [vmem:[#allocation2 + $0x8] sm:$0xff] %vm133, %v131
    %v135 = vld [vmem:[%s0 + $0x8] sm:$0xff]
    %137 = vrot.lane.b32.xlu0 %v135, 43
    %v138 = vpop.permute.xlu0 %137
    %vm140 = vcmask 908952
    %141 = vst.msk [vmem:[#allocation2 + $0x8] sm:$0xff] %vm140, %v138
    %v142 = vld [vmem:[%s0 + $0x8] sm:$0xff]
    %144 = vrot.lane.b32.xlu0 %v142, 45
    %v145 = vpop.permute.xlu0 %144
    %vm147 = vcmask 1048456
    %148 = vst.msk [vmem:[#allocation2 + $0x8] sm:$0xff] %vm147, %v145
    %vm149 = vcmask 105472
    %150 = vst.msk [vmem:[#allocation2 + $0x10] sm:$0xff] %vm149, %v145
    %v151 = vld [vmem:[%s0 + $0x8] sm:$0xff]
    %153 = vrot.lane.b32.xlu0 %v151, 47
    %v154 = vpop.permute.xlu0 %153
    %vm156 = vcmask 351352
    %157 = vst.msk [vmem:[#allocation2 + $0x10] sm:$0xff] %vm156, %v154
    %v158 = vld [vmem:[%s0 + $0x8] sm:$0xff]
    %v159 = vld [vmem:[%s0 + $0x10] sm:$0xff]
    %162 = vrot.lane.b32.xlu0 %v158, 49
    %v163 = vpop.permute.xlu0 %162
    %164 = vrot.lane.b32.xlu0 %v159, 49
    %v165 = vpop.permute.xlu0 %164
    %vm166 = vcmask 400384
    %v167 = vsel %vm166, %v163, %v165
    %vm169 = vcmask 597352
    %170 = vst.msk [vmem:[#allocation2 + $0x10] sm:$0xff] %vm169, %v167
    %v171 = vld [vmem:[%s0 + $0x10] sm:$0xff]
    %173 = vrot.lane.b32.xlu0 %v171, 51
    %v174 = vpop.permute.xlu0 %173
    %vm176 = vcmask 843352
    %177 = vst.msk [vmem:[#allocation2 + $0x10] sm:$0xff] %vm176, %v174
    %v178 = vld [vmem:[%s0 + $0x10] sm:$0xff]
    %180 = vrot.lane.b32.xlu0 %v178, 53
    %v181 = vpop.permute.xlu0 %180
    %vm183 = vcmask 1048392
    %184 = vst.msk [vmem:[#allocation2 + $0x10] sm:$0xff] %vm183, %v181
    %vm185 = vcmask 39936
    %186 = vst.msk [vmem:[#allocation2 + $0x18] sm:$0xff] %vm185, %v181
    %v187 = vld [vmem:[%s0 + $0x10] sm:$0xff]
    %189 = vrot.lane.b32.xlu0 %v187, 55
    %v190 = vpop.permute.xlu0 %189
    %vm192 = vcmask 285752
    %193 = vst.msk [vmem:[#allocation2 + $0x18] sm:$0xff] %vm192, %v190
    %v194 = vld [vmem:[%s0 + $0x10] sm:$0xff]
    %v195 = vld [vmem:[%s0 + $0x18] sm:$0xff]
    %198 = vrot.lane.b32.xlu0 %v194, 57
    %v199 = vpop.permute.xlu0 %198
    %200 = vrot.lane.b32.xlu0 %v195, 57
    %v201 = vpop.permute.xlu0 %200
    %vm202 = vcmask 465920
    %v203 = vsel %vm202, %v199, %v201
    %vm205 = vcmask 531752
    %206 = vst.msk [vmem:[#allocation2 + $0x18] sm:$0xff] %vm205, %v203
    %v207 = vld [vmem:[%s0 + $0x18] sm:$0xff]
    %209 = vrot.lane.b32.xlu0 %v207, 59
    %v210 = vpop.permute.xlu0 %209
    %vm212 = vcmask 777752
    %213 = vst.msk [vmem:[#allocation2 + $0x18] sm:$0xff] %vm212, %v210
    %v214 = vld [vmem:[%s0 + $0x18] sm:$0xff]
    %216 = vrot.lane.b32.xlu0 %v214, 61
    %v217 = vpop.permute.xlu0 %216
    %vm219 = vcmask 1023752
    %220 = vst.msk [vmem:[#allocation2 + $0x18] sm:$0xff] %vm219, %v217
    %v221 = vld [vmem:[%s0 + $0x18] sm:$0xff]
    %223 = vrot.lane.b32.xlu0 %v221, 63
    %v224 = vpop.permute.xlu0 %223
    %vm226 = vcmask 1048568
    %227 = vst.msk [vmem:[#allocation2 + $0x18] sm:$0xff] %vm226, %v224
    %vm228 = vcmask 220160
    %229 = vst.msk [vmem:[#allocation2 + $0x20] sm:$0xff] %vm228, %v224
    %v230 = vld [vmem:[%s0 + $0x18] sm:$0xff]
    %232 = vrot.lane.b32.xlu0 %v230, 65
    %v233 = vpop.permute.xlu0 %232
    %vm235 = vcmask 466152
    %236 = vst.msk [vmem:[#allocation2 + $0x20] sm:$0xff] %vm235, %v233
    %v237 = vld [vmem:[%s0 + $0x18] sm:$0xff]
    %v238 = vld [vmem:[%s0 + $0x20] sm:$0xff]
    %241 = vrot.lane.b32.xlu0 %v237, 67
    %v242 = vpop.permute.xlu0 %241
    %243 = vrot.lane.b32.xlu0 %v238, 67
    %v244 = vpop.permute.xlu0 %243
    %vm245 = vcmask 547840
    %v246 = vsel %vm245, %v242, %v244
    %vm248 = vcmask 712152
    %249 = vst.msk [vmem:[#allocation2 + $0x20] sm:$0xff] %vm248, %v246
    %v250 = vld [vmem:[%s0 + $0x20] sm:$0xff]
    %252 = vrot.lane.b32.xlu0 %v250, 69
    %v253 = vpop.permute.xlu0 %252
    %vm255 = vcmask 958152
    %256 = vst.msk [vmem:[#allocation2 + $0x20] sm:$0xff] %vm255, %v253
    %v257 = vld [vmem:[%s0 + $0x20] sm:$0xff]
    %259 = vrot.lane.b32.xlu0 %v257, 71
    %v260 = vpop.permute.xlu0 %259
    %vm262 = vcmask 1048504
    %263 = vst.msk [vmem:[#allocation2 + $0x20] sm:$0xff] %vm262, %v260
    %vm264 = vcmask 154624
    %265 = vst.msk [vmem:[#allocation2 + $0x28] sm:$0xff] %vm264, %v260
    %v266 = vld [vmem:[%s0 + $0x20] sm:$0xff]
    %268 = vrot.lane.b32.xlu0 %v266, 73
    %v269 = vpop.permute.xlu0 %268
    %vm271 = vcmask 400552
    %272 = vst.msk [vmem:[#allocation2 + $0x28] sm:$0xff] %vm271, %v269
    %v273 = vld [vmem:[%s0 + $0x20] sm:$0xff]
    %v274 = vld [vmem:[%s0 + $0x28] sm:$0xff]
    %277 = vrot.lane.b32.xlu0 %v273, 75
    %v278 = vpop.permute.xlu0 %277
    %279 = vrot.lane.b32.xlu0 %v274, 75
    %v280 = vpop.permute.xlu0 %279
    %vm281 = vcmask 613376
    %v282 = vsel %vm281, %v278, %v280
    %vm284 = vcmask 646552
    %285 = vst.msk [vmem:[#allocation2 + $0x28] sm:$0xff] %vm284, %v282
    %v286 = vld [vmem:[%s0 + $0x28] sm:$0xff]
    %288 = vrot.lane.b32.xlu0 %v286, 77
    %v289 = vpop.permute.xlu0 %288
    %vm291 = vcmask 892552
    %292 = vst.msk [vmem:[#allocation2 + $0x28] sm:$0xff] %vm291, %v289
    %v293 = vld [vmem:[%s0 + $0x28] sm:$0xff]
    %295 = vrot.lane.b32.xlu0 %v293, 79
    %v296 = vpop.permute.xlu0 %295
    %vm298 = vcmask 1048440
    %299 = vst.msk [vmem:[#allocation2 + $0x28] sm:$0xff] %vm298, %v296
    %vm300 = vcmask 89088
    %301 = vst.msk [vmem:[#allocation2 + $0x30] sm:$0xff] %vm300, %v296
    %v302 = vld [vmem:[%s0 + $0x28] sm:$0xff]
    %304 = vrot.lane.b32.xlu0 %v302, 81
    %v305 = vpop.permute.xlu0 %304
    %vm307 = vcmask 334952
    %308 = vst.msk [vmem:[#allocation2 + $0x30] sm:$0xff] %vm307, %v305
    %v309 = vld [vmem:[%s0 + $0x28] sm:$0xff]
    %311 = vrot.lane.b32.xlu0 %v309, 83
    %v312 = vpop.permute.xlu0 %311
    %vm314 = vcmask 580952
    %315 = vst.msk [vmem:[#allocation2 + $0x30] sm:$0xff] %vm314, %v312
    %v316 = vld [vmem:[%s0 + $0x28] sm:$0xff]
    %v317 = vld [vmem:[%s0 + $0x30] sm:$0xff]
    %320 = vrot.lane.b32.xlu0 %v316, 85
    %v321 = vpop.permute.xlu0 %320
    %322 = vrot.lane.b32.xlu0 %v317, 85
    %v323 = vpop.permute.xlu0 %322
    %vm324 = vcmask 695296
    %v325 = vsel %vm324, %v321, %v323
    %vm327 = vcmask 826952
    %328 = vst.msk [vmem:[#allocation2 + $0x30] sm:$0xff] %vm327, %v325
    %v329 = vlaneseq
    %v330 = vshrl.u32 %v329, 7
    %v331 = vadd.s32 %v330, 8
    %v332 = vadd.s32 %v330, 16
    %v333 = vadd.s32 %v330, 24
    %v334 = vadd.s32 %v330, 32
    %v335 = vadd.s32 %v330, 40
    %v336 = vadd.s32 %v330, 48
    %v337 = vadd.s32 %v330, 56
    %v338 = vadd.s32 %v330, 64
    %v339 = vadd.s32 %v330, 72
    %v340 = vadd.s32 %v330, 80
    %v341 = vadd.s32 %v330, 88
    %v342 = vadd.s32 %v330, 96
    %v343 = vadd.s32 %v330, 104
    %v344 = vadd.s32 %v330, 112
    %v345 = vadd.s32 %v330, 120
    %v346 = vadd.s32 %v330, 128
    %v347 = vadd.s32 %v330, 136
    %v348 = vadd.s32 %v330, 144
    %v349 = vadd.s32 %v330, 152
    %v350 = vadd.s32 %v330, 160
    %v351 = vadd.s32 %v330, 168
    %v352 = vadd.s32 %v330, 176
    %v353 = vadd.s32 %v330, 184
    %v354 = vadd.s32 %v330, 192
    %v355 = vadd.s32 %v330, 200
    %v356 = vadd.s32 %v330, 208
    %v357 = vadd.s32 %v330, 216
    %v358 = vadd.s32 %v330, 224
    %v359 = vadd.s32 %v330, 232
    %v360 = vadd.s32 %v330, 240
    %v361 = vadd.s32 %v330, 248
    %v362 = vadd.s32 %v330, 256
    %v363 = vadd.s32 %v330, 264
    %v364 = vadd.s32 %v330, 272
    %v365 = vadd.s32 %v330, 280
    %v366 = vadd.s32 %v330, 288
    %v367 = vadd.s32 %v330, 296
    %v368 = vadd.s32 %v330, 304
    %v369 = vadd.s32 %v330, 312
    %v370 = vadd.s32 %v330, 320
    %v371 = vadd.s32 %v330, 328
    %v372 = vadd.s32 %v330, 336
    %v373 = vadd.s32 %v330, 344
    %v374 = vadd.s32 %v330, 352
    %v375 = vadd.s32 %v330, 360
    %v376 = vadd.s32 %v330, 368
    %v377 = vadd.s32 %v330, 376
    %v378 = vadd.s32 %v330, 384
    %v379 = vadd.s32 %v330, 392
    %v380 = vadd.s32 %v330, 400
    %v381 = vadd.s32 %v330, 408
    %v382 = vadd.s32 %v330, 416
    %v383 = vadd.s32 %v330, 424
    %v384 = vadd.s32 %v330, 432
    %v385 = vadd.s32 %v330, 440
    %v386 = vadd.s32 %v330, 448
    %v387 = vadd.s32 %v330, 456
    %v388 = vadd.s32 %v330, 464
    %v389 = vadd.s32 %v330, 472
    %v390 = vadd.s32 %v330, 480
    %v391 = vadd.s32 %v330, 488
    %v392 = vadd.s32 %v330, 496
    %v393 = vadd.s32 %v330, 504
    %v394 = vadd.s32 %v330, 512
    %v395 = vadd.s32 %v330, 520
    %v396 = vadd.s32 %v330, 528
    %v397 = vadd.s32 %v330, 536
    %v398 = vadd.s32 %v330, 544
    %v399 = vadd.s32 %v330, 552
    %v400 = vadd.s32 %v330, 560
    %v401 = vadd.s32 %v330, 568
    %v402 = vadd.s32 %v330, 576
    %v403 = vadd.s32 %v330, 584
    %v404 = vadd.s32 %v330, 592
    %v405 = vadd.s32 %v330, 600
    %v406 = vadd.s32 %v330, 608
    %v407 = vadd.s32 %v330, 616
    %v408 = vadd.s32 %v330, 624
    %v409 = vadd.s32 %v330, 632
    %v410 = vadd.s32 %v330, 640
    %v411 = vadd.s32 %v330, 648
    %v412 = vadd.s32 %v330, 656
    %v413 = vadd.s32 %v330, 664
    %v414 = vadd.s32 %v330, 672
    %v415 = vadd.s32 %v330, 680
    %v416 = vadd.s32 %v330, 688
    %v417 = vadd.s32 %v330, 696
    %v418 = vadd.s32 %v330, 704
    %v419 = vadd.s32 %v330, 712
    %v420 = vadd.s32 %v330, 720
    %v421 = vadd.s32 %v330, 728
    %v422 = vadd.s32 %v330, 736
    %v423 = vadd.s32 %v330, 744
    %v424 = vadd.s32 %v330, 752
    %v425 = vadd.s32 %v330, 760
    %v426 = vadd.s32 %v330, 768
    %v427 = vadd.s32 %v330, 776
    %v428 = vadd.s32 %v330, 784
    %v429 = vadd.s32 %v330, 792
    %v430 = vadd.s32 %v330, 800
    %v431 = vlaneseq
    %v432 = vand.u32 %v431, 127
    %v433 = vadd.s32 %v432, 128
    %v434 = vsub.s32 %v432, 17
    %v435 = vsub.s32 %v433, 17
    %v436 = vshra.s32 %v434, 4
    %v437 = vshra.s32 %v435, 4
    %v438 = vand.u32 %v434, 15
    %v439 = vand.u32 %v435, 15
    %vm440 = vcmp.ge.s32.totalorder %v434, 0
    %vm441 = vcmp.ge.s32.totalorder %v435, 0
    %vm442 = vcmp.lt.s32.totalorder %v436, 14
    %vm443 = vcmp.lt.s32.totalorder %v437, 14
    %vm444 = vmand %vm440, %vm442
    %vm445 = vmand %vm441, %vm443
    %vm446 = vcmp.lt.s32.totalorder %v438, 14
    %vm447 = vcmp.lt.s32.totalorder %v439, 14
    %vm448 = vmand %vm444, %vm446
    %vm449 = vmand %vm445, %vm447
    %v450 = vmul.u32 %v436, 60
    %v451 = vmul.u32 %v437, 60
    %v452 = vmul.u32 %v438, 2
    %v453 = vmul.u32 %v439, 2
    %v454 = vadd.s32 %v450, %v452
    %v455 = vadd.s32 %v451, %v453
    %vm456 = vcmp.eq.s32.totalorder %v330, %v454
    %vm457 = vcmp.eq.s32.totalorder %v330, %v455
    %vm458 = vcmp.eq.s32.totalorder %v331, %v454
    %vm459 = vcmp.eq.s32.totalorder %v331, %v455
    %vm460 = vcmp.eq.s32.totalorder %v332, %v454
    %vm461 = vcmp.eq.s32.totalorder %v332, %v455
    %vm462 = vcmp.eq.s32.totalorder %v333, %v454
    %vm463 = vcmp.eq.s32.totalorder %v333, %v455
    %vm464 = vcmp.eq.s32.totalorder %v334, %v454
    %vm465 = vcmp.eq.s32.totalorder %v334, %v455
    %vm466 = vcmp.eq.s32.totalorder %v335, %v454
    %vm467 = vcmp.eq.s32.totalorder %v335, %v455
    %vm468 = vcmp.eq.s32.totalorder %v336, %v454
    %vm469 = vcmp.eq.s32.totalorder %v336, %v455
    %vm470 = vcmp.eq.s32.totalorder %v337, %v454
    %vm471 = vcmp.eq.s32.totalorder %v337, %v455
    %vm472 = vcmp.eq.s32.totalorder %v338, %v454
    %vm473 = vcmp.eq.s32.totalorder %v338, %v455
    %vm474 = vcmp.eq.s32.totalorder %v339, %v454
    %vm475 = vcmp.eq.s32.totalorder %v339, %v455
    %vm476 = vcmp.eq.s32.totalorder %v340, %v454
    %vm477 = vcmp.eq.s32.totalorder %v340, %v455
    %vm478 = vcmp.eq.s32.totalorder %v341, %v454
    %vm479 = vcmp.eq.s32.totalorder %v341, %v455
    %vm480 = vcmp.eq.s32.totalorder %v342, %v454
    %vm481 = vcmp.eq.s32.totalorder %v342, %v455
    %vm482 = vcmp.eq.s32.totalorder %v343, %v454
    %vm483 = vcmp.eq.s32.totalorder %v343, %v455
    %vm484 = vcmp.eq.s32.totalorder %v344, %v454
    %vm485 = vcmp.eq.s32.totalorder %v344, %v455
    %vm486 = vcmp.eq.s32.totalorder %v345, %v454
    %vm487 = vcmp.eq.s32.totalorder %v345, %v455
    %vm488 = vcmp.eq.s32.totalorder %v346, %v454
    %vm489 = vcmp.eq.s32.totalorder %v346, %v455
    %vm490 = vcmp.eq.s32.totalorder %v347, %v454
    %vm491 = vcmp.eq.s32.totalorder %v347, %v455
    %vm492 = vcmp.eq.s32.totalorder %v348, %v454
    %vm493 = vcmp.eq.s32.totalorder %v348, %v455
    %vm494 = vcmp.eq.s32.totalorder %v349, %v454
    %vm495 = vcmp.eq.s32.totalorder %v349, %v455
    %vm496 = vcmp.eq.s32.totalorder %v350, %v454
    %vm497 = vcmp.eq.s32.totalorder %v350, %v455
    %vm498 = vcmp.eq.s32.totalorder %v351, %v454
    %vm499 = vcmp.eq.s32.totalorder %v351, %v455
    %vm500 = vcmp.eq.s32.totalorder %v352, %v454
    %vm501 = vcmp.eq.s32.totalorder %v352, %v455
    %vm502 = vcmp.eq.s32.totalorder %v353, %v454
    %vm503 = vcmp.eq.s32.totalorder %v353, %v455
    %vm504 = vcmp.eq.s32.totalorder %v354, %v454
    %vm505 = vcmp.eq.s32.totalorder %v354, %v455
    %vm506 = vcmp.eq.s32.totalorder %v355, %v454
    %vm507 = vcmp.eq.s32.totalorder %v355, %v455
    %vm508 = vcmp.eq.s32.totalorder %v356, %v454
    %vm509 = vcmp.eq.s32.totalorder %v356, %v455
    %vm510 = vcmp.eq.s32.totalorder %v357, %v454
    %vm511 = vcmp.eq.s32.totalorder %v357, %v455
    %vm512 = vcmp.eq.s32.totalorder %v358, %v454
    %vm513 = vcmp.eq.s32.totalorder %v358, %v455
    %vm514 = vcmp.eq.s32.totalorder %v359, %v454
    %vm515 = vcmp.eq.s32.totalorder %v359, %v455
    %vm516 = vcmp.eq.s32.totalorder %v360, %v454
    %vm517 = vcmp.eq.s32.totalorder %v360, %v455
    %vm518 = vcmp.eq.s32.totalorder %v361, %v454
    %vm519 = vcmp.eq.s32.totalorder %v361, %v455
    %vm520 = vcmp.eq.s32.totalorder %v362, %v454
    %vm521 = vcmp.eq.s32.totalorder %v362, %v455
    %vm522 = vcmp.eq.s32.totalorder %v363, %v454
    %vm523 = vcmp.eq.s32.totalorder %v363, %v455
    %vm524 = vcmp.eq.s32.totalorder %v364, %v454
    %vm525 = vcmp.eq.s32.totalorder %v364, %v455
    %vm526 = vcmp.eq.s32.totalorder %v365, %v454
    %vm527 = vcmp.eq.s32.totalorder %v365, %v455
    %vm528 = vcmp.eq.s32.totalorder %v366, %v454
    %vm529 = vcmp.eq.s32.totalorder %v366, %v455
    %vm530 = vcmp.eq.s32.totalorder %v367, %v454
    %vm531 = vcmp.eq.s32.totalorder %v367, %v455
    %vm532 = vcmp.eq.s32.totalorder %v368, %v454
    %vm533 = vcmp.eq.s32.totalorder %v368, %v455
    %vm534 = vcmp.eq.s32.totalorder %v369, %v454
    %vm535 = vcmp.eq.s32.totalorder %v369, %v455
    %vm536 = vcmp.eq.s32.totalorder %v370, %v454
    %vm537 = vcmp.eq.s32.totalorder %v370, %v455
    %vm538 = vcmp.eq.s32.totalorder %v371, %v454
    %vm539 = vcmp.eq.s32.totalorder %v371, %v455
    %vm540 = vcmp.eq.s32.totalorder %v372, %v454
    %vm541 = vcmp.eq.s32.totalorder %v372, %v455
    %vm542 = vcmp.eq.s32.totalorder %v373, %v454
    %vm543 = vcmp.eq.s32.totalorder %v373, %v455
    %vm544 = vcmp.eq.s32.totalorder %v374, %v454
    %vm545 = vcmp.eq.s32.totalorder %v374, %v455
    %vm546 = vcmp.eq.s32.totalorder %v375, %v454
    %vm547 = vcmp.eq.s32.totalorder %v375, %v455
    %vm548 = vcmp.eq.s32.totalorder %v376, %v454
    %vm549 = vcmp.eq.s32.totalorder %v376, %v455
    %vm550 = vcmp.eq.s32.totalorder %v377, %v454
    %vm551 = vcmp.eq.s32.totalorder %v377, %v455
    %vm552 = vcmp.eq.s32.totalorder %v378, %v454
    %vm553 = vcmp.eq.s32.totalorder %v378, %v455
    %vm554 = vcmp.eq.s32.totalorder %v379, %v454
    %vm555 = vcmp.eq.s32.totalorder %v379, %v455
    %vm556 = vcmp.eq.s32.totalorder %v380, %v454
    %vm557 = vcmp.eq.s32.totalorder %v380, %v455
    %vm558 = vcmp.eq.s32.totalorder %v381, %v454
    %vm559 = vcmp.eq.s32.totalorder %v381, %v455
    %vm560 = vcmp.eq.s32.totalorder %v382, %v454
    %vm561 = vcmp.eq.s32.totalorder %v382, %v455
    %vm562 = vcmp.eq.s32.totalorder %v383, %v454
    %vm563 = vcmp.eq.s32.totalorder %v383, %v455
    %vm564 = vcmp.eq.s32.totalorder %v384, %v454
    %vm565 = vcmp.eq.s32.totalorder %v384, %v455
    %vm566 = vcmp.eq.s32.totalorder %v385, %v454
    %vm567 = vcmp.eq.s32.totalorder %v385, %v455
    %vm568 = vcmp.eq.s32.totalorder %v386, %v454
    %vm569 = vcmp.eq.s32.totalorder %v386, %v455
    %vm570 = vcmp.eq.s32.totalorder %v387, %v454
    %vm571 = vcmp.eq.s32.totalorder %v387, %v455
    %vm572 = vcmp.eq.s32.totalorder %v388, %v454
    %vm573 = vcmp.eq.s32.totalorder %v388, %v455
    %vm574 = vcmp.eq.s32.totalorder %v389, %v454
    %vm575 = vcmp.eq.s32.totalorder %v389, %v455
    %vm576 = vcmp.eq.s32.totalorder %v390, %v454
    %vm577 = vcmp.eq.s32.totalorder %v390, %v455
    %vm578 = vcmp.eq.s32.totalorder %v391, %v454
    %vm579 = vcmp.eq.s32.totalorder %v391, %v455
    %vm580 = vcmp.eq.s32.totalorder %v392, %v454
    %vm581 = vcmp.eq.s32.totalorder %v392, %v455
    %vm582 = vcmp.eq.s32.totalorder %v393, %v454
    %vm583 = vcmp.eq.s32.totalorder %v393, %v455
    %vm584 = vcmp.eq.s32.totalorder %v394, %v454
    %vm585 = vcmp.eq.s32.totalorder %v394, %v455
    %vm586 = vcmp.eq.s32.totalorder %v395, %v454
    %vm587 = vcmp.eq.s32.totalorder %v395, %v455
    %vm588 = vcmp.eq.s32.totalorder %v396, %v454
    %vm589 = vcmp.eq.s32.totalorder %v396, %v455
    %vm590 = vcmp.eq.s32.totalorder %v397, %v454
    %vm591 = vcmp.eq.s32.totalorder %v397, %v455
    %vm592 = vcmp.eq.s32.totalorder %v398, %v454
    %vm593 = vcmp.eq.s32.totalorder %v398, %v455
    %vm594 = vcmp.eq.s32.totalorder %v399, %v454
    %vm595 = vcmp.eq.s32.totalorder %v399, %v455
    %vm596 = vcmp.eq.s32.totalorder %v400, %v454
    %vm597 = vcmp.eq.s32.totalorder %v400, %v455
    %vm598 = vcmp.eq.s32.totalorder %v401, %v454
    %vm599 = vcmp.eq.s32.totalorder %v401, %v455
    %vm600 = vcmp.eq.s32.totalorder %v402, %v454
    %vm601 = vcmp.eq.s32.totalorder %v402, %v455
    %vm602 = vcmp.eq.s32.totalorder %v403, %v454
    %vm603 = vcmp.eq.s32.totalorder %v403, %v455
    %vm604 = vcmp.eq.s32.totalorder %v404, %v454
    %vm605 = vcmp.eq.s32.totalorder %v404, %v455
    %vm606 = vcmp.eq.s32.totalorder %v405, %v454
    %vm607 = vcmp.eq.s32.totalorder %v405, %v455
    %vm608 = vcmp.eq.s32.totalorder %v406, %v454
    %vm609 = vcmp.eq.s32.totalorder %v406, %v455
    %vm610 = vcmp.eq.s32.totalorder %v407, %v454
    %vm611 = vcmp.eq.s32.totalorder %v407, %v455
    %vm612 = vcmp.eq.s32.totalorder %v408, %v454
    %vm613 = vcmp.eq.s32.totalorder %v408, %v455
    %vm614 = vcmp.eq.s32.totalorder %v409, %v454
    %vm615 = vcmp.eq.s32.totalorder %v409, %v455
    %vm616 = vcmp.eq.s32.totalorder %v410, %v454
    %vm617 = vcmp.eq.s32.totalorder %v410, %v455
    %vm618 = vcmp.eq.s32.totalorder %v411, %v454
    %vm619 = vcmp.eq.s32.totalorder %v411, %v455
    %vm620 = vcmp.eq.s32.totalorder %v412, %v454
    %vm621 = vcmp.eq.s32.totalorder %v412, %v455
    %vm622 = vcmp.eq.s32.totalorder %v413, %v454
    %vm623 = vcmp.eq.s32.totalorder %v413, %v455
    %vm624 = vcmp.eq.s32.totalorder %v414, %v454
    %vm625 = vcmp.eq.s32.totalorder %v414, %v455
    %vm626 = vcmp.eq.s32.totalorder %v415, %v454
    %vm627 = vcmp.eq.s32.totalorder %v415, %v455
    %vm628 = vcmp.eq.s32.totalorder %v416, %v454
    %vm629 = vcmp.eq.s32.totalorder %v416, %v455
    %vm630 = vcmp.eq.s32.totalorder %v417, %v454
    %vm631 = vcmp.eq.s32.totalorder %v417, %v455
    %vm632 = vcmp.eq.s32.totalorder %v418, %v454
    %vm633 = vcmp.eq.s32.totalorder %v418, %v455
    %vm634 = vcmp.eq.s32.totalorder %v419, %v454
    %vm635 = vcmp.eq.s32.totalorder %v419, %v455
    %vm636 = vcmp.eq.s32.totalorder %v420, %v454
    %vm637 = vcmp.eq.s32.totalorder %v420, %v455
    %vm638 = vcmp.eq.s32.totalorder %v421, %v454
    %vm639 = vcmp.eq.s32.totalorder %v421, %v455
    %vm640 = vcmp.eq.s32.totalorder %v422, %v454
    %vm641 = vcmp.eq.s32.totalorder %v422, %v455
    %vm642 = vcmp.eq.s32.totalorder %v423, %v454
    %vm643 = vcmp.eq.s32.totalorder %v423, %v455
    %vm644 = vcmp.eq.s32.totalorder %v424, %v454
    %vm645 = vcmp.eq.s32.totalorder %v424, %v455
    %vm646 = vcmp.eq.s32.totalorder %v425, %v454
    %vm647 = vcmp.eq.s32.totalorder %v425, %v455
    %vm648 = vcmp.eq.s32.totalorder %v426, %v454
    %vm649 = vcmp.eq.s32.totalorder %v426, %v455
    %vm650 = vcmp.eq.s32.totalorder %v427, %v454
    %vm651 = vcmp.eq.s32.totalorder %v427, %v455
    %vm652 = vcmp.eq.s32.totalorder %v428, %v454
    %vm653 = vcmp.eq.s32.totalorder %v428, %v455
    %vm654 = vcmp.eq.s32.totalorder %v429, %v454
    %vm655 = vcmp.eq.s32.totalorder %v429, %v455
    %vm656 = vcmp.eq.s32.totalorder %v430, %v454
    %vm657 = vcmp.eq.s32.totalorder %v430, %v455
    %vm658 = vmand %vm448, %vm456
    %vm659 = vmand %vm449, %vm457
    %vm660 = vmand %vm448, %vm458
    %vm661 = vmand %vm449, %vm459
    %vm662 = vmand %vm448, %vm460
    %vm663 = vmand %vm449, %vm461
    %vm664 = vmand %vm448, %vm462
    %vm665 = vmand %vm449, %vm463
    %vm666 = vmand %vm448, %vm464
    %vm667 = vmand %vm449, %vm465
    %vm668 = vmand %vm448, %vm466
    %vm669 = vmand %vm449, %vm467
    %vm670 = vmand %vm448, %vm468
    %vm671 = vmand %vm449, %vm469
    %vm672 = vmand %vm448, %vm470
    %vm673 = vmand %vm449, %vm471
    %vm674 = vmand %vm448, %vm472
    %vm675 = vmand %vm449, %vm473
    %vm676 = vmand %vm448, %vm474
    %vm677 = vmand %vm449, %vm475
    %vm678 = vmand %vm448, %vm476
    %vm679 = vmand %vm449, %vm477
    %vm680 = vmand %vm448, %vm478
    %vm681 = vmand %vm449, %vm479
    %vm682 = vmand %vm448, %vm480
    %vm683 = vmand %vm449, %vm481
    %vm684 = vmand %vm448, %vm482
    %vm685 = vmand %vm449, %vm483
    %vm686 = vmand %vm448, %vm484
    %vm687 = vmand %vm449, %vm485
    %vm688 = vmand %vm448, %vm486
    %vm689 = vmand %vm449, %vm487
    %vm690 = vmand %vm448, %vm488
    %vm691 = vmand %vm449, %vm489
    %vm692 = vmand %vm448, %vm490
    %vm693 = vmand %vm449, %vm491
    %vm694 = vmand %vm448, %vm492
    %vm695 = vmand %vm449, %vm493
    %vm696 = vmand %vm448, %vm494
    %vm697 = vmand %vm449, %vm495
    %vm698 = vmand %vm448, %vm496
    %vm699 = vmand %vm449, %vm497
    %vm700 = vmand %vm448, %vm498
    %vm701 = vmand %vm449, %vm499
    %vm702 = vmand %vm448, %vm500
    %vm703 = vmand %vm449, %vm501
    %vm704 = vmand %vm448, %vm502
    %vm705 = vmand %vm449, %vm503
    %vm706 = vmand %vm448, %vm504
    %vm707 = vmand %vm449, %vm505
    %vm708 = vmand %vm448, %vm506
    %vm709 = vmand %vm449, %vm507
    %vm710 = vmand %vm448, %vm508
    %vm711 = vmand %vm449, %vm509
    %vm712 = vmand %vm448, %vm510
    %vm713 = vmand %vm449, %vm511
    %vm714 = vmand %vm448, %vm512
    %vm715 = vmand %vm449, %vm513
    %vm716 = vmand %vm448, %vm514
    %vm717 = vmand %vm449, %vm515
    %vm718 = vmand %vm448, %vm516
    %vm719 = vmand %vm449, %vm517
    %vm720 = vmand %vm448, %vm518
    %vm721 = vmand %vm449, %vm519
    %vm722 = vmand %vm448, %vm520
    %vm723 = vmand %vm449, %vm521
    %vm724 = vmand %vm448, %vm522
    %vm725 = vmand %vm449, %vm523
    %vm726 = vmand %vm448, %vm524
    %vm727 = vmand %vm449, %vm525
    %vm728 = vmand %vm448, %vm526
    %vm729 = vmand %vm449, %vm527
    %vm730 = vmand %vm448, %vm528
    %vm731 = vmand %vm449, %vm529
    %vm732 = vmand %vm448, %vm530
    %vm733 = vmand %vm449, %vm531
    %vm734 = vmand %vm448, %vm532
    %vm735 = vmand %vm449, %vm533
    %vm736 = vmand %vm448, %vm534
    %vm737 = vmand %vm449, %vm535
    %vm738 = vmand %vm448, %vm536
    %vm739 = vmand %vm449, %vm537
    %vm740 = vmand %vm448, %vm538
    %vm741 = vmand %vm449, %vm539
    %vm742 = vmand %vm448, %vm540
    %vm743 = vmand %vm449, %vm541
    %vm744 = vmand %vm448, %vm542
    %vm745 = vmand %vm449, %vm543
    %vm746 = vmand %vm448, %vm544
    %vm747 = vmand %vm449, %vm545
    %vm748 = vmand %vm448, %vm546
    %vm749 = vmand %vm449, %vm547
    %vm750 = vmand %vm448, %vm548
    %vm751 = vmand %vm449, %vm549
    %vm752 = vmand %vm448, %vm550
    %vm753 = vmand %vm449, %vm551
    %vm754 = vmand %vm448, %vm552
    %vm755 = vmand %vm449, %vm553
    %vm756 = vmand %vm448, %vm554
    %vm757 = vmand %vm449, %vm555
    %vm758 = vmand %vm448, %vm556
    %vm759 = vmand %vm449, %vm557
    %vm760 = vmand %vm448, %vm558
    %vm761 = vmand %vm449, %vm559
    %vm762 = vmand %vm448, %vm560
    %vm763 = vmand %vm449, %vm561
    %vm764 = vmand %vm448, %vm562
    %vm765 = vmand %vm449, %vm563
    %vm766 = vmand %vm448, %vm564
    %vm767 = vmand %vm449, %vm565
    %vm768 = vmand %vm448, %vm566
    %vm769 = vmand %vm449, %vm567
    %vm770 = vmand %vm448, %vm568
    %vm771 = vmand %vm449, %vm569
    %vm772 = vmand %vm448, %vm570
    %vm773 = vmand %vm449, %vm571
    %vm774 = vmand %vm448, %vm572
    %vm775 = vmand %vm449, %vm573
    %vm776 = vmand %vm448, %vm574
    %vm777 = vmand %vm449, %vm575
    %vm778 = vmand %vm448, %vm576
    %vm779 = vmand %vm449, %vm577
    %vm780 = vmand %vm448, %vm578
    %vm781 = vmand %vm449, %vm579
    %vm782 = vmand %vm448, %vm580
    %vm783 = vmand %vm449, %vm581
    %vm784 = vmand %vm448, %vm582
    %vm785 = vmand %vm449, %vm583
    %vm786 = vmand %vm448, %vm584
    %vm787 = vmand %vm449, %vm585
    %vm788 = vmand %vm448, %vm586
    %vm789 = vmand %vm449, %vm587
    %vm790 = vmand %vm448, %vm588
    %vm791 = vmand %vm449, %vm589
    %vm792 = vmand %vm448, %vm590
    %vm793 = vmand %vm449, %vm591
    %vm794 = vmand %vm448, %vm592
    %vm795 = vmand %vm449, %vm593
    %vm796 = vmand %vm448, %vm594
    %vm797 = vmand %vm449, %vm595
    %vm798 = vmand %vm448, %vm596
    %vm799 = vmand %vm449, %vm597
    %vm800 = vmand %vm448, %vm598
    %vm801 = vmand %vm449, %vm599
    %vm802 = vmand %vm448, %vm600
    %vm803 = vmand %vm449, %vm601
    %vm804 = vmand %vm448, %vm602
    %vm805 = vmand %vm449, %vm603
    %vm806 = vmand %vm448, %vm604
    %vm807 = vmand %vm449, %vm605
    %vm808 = vmand %vm448, %vm606
    %vm809 = vmand %vm449, %vm607
    %vm810 = vmand %vm448, %vm608
    %vm811 = vmand %vm449, %vm609
    %vm812 = vmand %vm448, %vm610
    %vm813 = vmand %vm449, %vm611
    %vm814 = vmand %vm448, %vm612
    %vm815 = vmand %vm449, %vm613
    %vm816 = vmand %vm448, %vm614
    %vm817 = vmand %vm449, %vm615
    %vm818 = vmand %vm448, %vm616
    %vm819 = vmand %vm449, %vm617
    %vm820 = vmand %vm448, %vm618
    %vm821 = vmand %vm449, %vm619
    %vm822 = vmand %vm448, %vm620
    %vm823 = vmand %vm449, %vm621
    %vm824 = vmand %vm448, %vm622
    %vm825 = vmand %vm449, %vm623
    %vm826 = vmand %vm448, %vm624
    %vm827 = vmand %vm449, %vm625
    %vm828 = vmand %vm448, %vm626
    %vm829 = vmand %vm449, %vm627
    %vm830 = vmand %vm448, %vm628
    %vm831 = vmand %vm449, %vm629
    %vm832 = vmand %vm448, %vm630
    %vm833 = vmand %vm449, %vm631
    %vm834 = vmand %vm448, %vm632
    %vm835 = vmand %vm449, %vm633
    %vm836 = vmand %vm448, %vm634
    %vm837 = vmand %vm449, %vm635
    %vm838 = vmand %vm448, %vm636
    %vm839 = vmand %vm449, %vm637
    %vm840 = vmand %vm448, %vm638
    %vm841 = vmand %vm449, %vm639
    %vm842 = vmand %vm448, %vm640
    %vm843 = vmand %vm449, %vm641
    %vm844 = vmand %vm448, %vm642
    %vm845 = vmand %vm449, %vm643
    %vm846 = vmand %vm448, %vm644
    %vm847 = vmand %vm449, %vm645
    %vm848 = vmand %vm448, %vm646
    %vm849 = vmand %vm449, %vm647
    %vm850 = vmand %vm448, %vm648
    %vm851 = vmand %vm449, %vm649
    %vm852 = vmand %vm448, %vm650
    %vm853 = vmand %vm449, %vm651
    %vm854 = vmand %vm448, %vm652
    %vm855 = vmand %vm449, %vm653
    %vm856 = vmand %vm448, %vm654
    %vm857 = vmand %vm449, %vm655
    %vm858 = vmand %vm448, %vm656
    %vm859 = vmand %vm449, %vm657
    %v860 = vsel %vm658, 1.0, 0.0
    %v861 = vsel %vm659, 1.0, 0.0
    %v862 = vsel %vm660, 1.0, 0.0
    %v863 = vsel %vm661, 1.0, 0.0
    %v864 = vsel %vm662, 1.0, 0.0
    %v865 = vsel %vm663, 1.0, 0.0
    %v866 = vsel %vm664, 1.0, 0.0
    %v867 = vsel %vm665, 1.0, 0.0
    %v868 = vsel %vm666, 1.0, 0.0
    %v869 = vsel %vm667, 1.0, 0.0
    %v870 = vsel %vm668, 1.0, 0.0
    %v871 = vsel %vm669, 1.0, 0.0
    %v872 = vsel %vm670, 1.0, 0.0
    %v873 = vsel %vm671, 1.0, 0.0
    %v874 = vsel %vm672, 1.0, 0.0
    %v875 = vsel %vm673, 1.0, 0.0
    %v876 = vsel %vm674, 1.0, 0.0
    %v877 = vsel %vm675, 1.0, 0.0
    %v878 = vsel %vm676, 1.0, 0.0
    %v879 = vsel %vm677, 1.0, 0.0
    %v880 = vsel %vm678, 1.0, 0.0
    %v881 = vsel %vm679, 1.0, 0.0
    %v882 = vsel %vm680, 1.0, 0.0
    %v883 = vsel %vm681, 1.0, 0.0
    %v884 = vsel %vm682, 1.0, 0.0
    %v885 = vsel %vm683, 1.0, 0.0
    %v886 = vsel %vm684, 1.0, 0.0
    %v887 = vsel %vm685, 1.0, 0.0
    %v888 = vsel %vm686, 1.0, 0.0
    %v889 = vsel %vm687, 1.0, 0.0
    %v890 = vsel %vm688, 1.0, 0.0
    %v891 = vsel %vm689, 1.0, 0.0
    %v892 = vsel %vm690, 1.0, 0.0
    %v893 = vsel %vm691, 1.0, 0.0
    %v894 = vsel %vm692, 1.0, 0.0
    %v895 = vsel %vm693, 1.0, 0.0
    %v896 = vsel %vm694, 1.0, 0.0
    %v897 = vsel %vm695, 1.0, 0.0
    %v898 = vsel %vm696, 1.0, 0.0
    %v899 = vsel %vm697, 1.0, 0.0
    %v900 = vsel %vm698, 1.0, 0.0
    %v901 = vsel %vm699, 1.0, 0.0
    %v902 = vsel %vm700, 1.0, 0.0
    %v903 = vsel %vm701, 1.0, 0.0
    %v904 = vsel %vm702, 1.0, 0.0
    %v905 = vsel %vm703, 1.0, 0.0
    %v906 = vsel %vm704, 1.0, 0.0
    %v907 = vsel %vm705, 1.0, 0.0
    %v908 = vsel %vm706, 1.0, 0.0
    %v909 = vsel %vm707, 1.0, 0.0
    %v910 = vsel %vm708, 1.0, 0.0
    %v911 = vsel %vm709, 1.0, 0.0
    %v912 = vsel %vm710, 1.0, 0.0
    %v913 = vsel %vm711, 1.0, 0.0
    %v914 = vsel %vm712, 1.0, 0.0
    %v915 = vsel %vm713, 1.0, 0.0
    %v916 = vsel %vm714, 1.0, 0.0
    %v917 = vsel %vm715, 1.0, 0.0
    %v918 = vsel %vm716, 1.0, 0.0
    %v919 = vsel %vm717, 1.0, 0.0
    %v920 = vsel %vm718, 1.0, 0.0
    %v921 = vsel %vm719, 1.0, 0.0
    %v922 = vsel %vm720, 1.0, 0.0
    %v923 = vsel %vm721, 1.0, 0.0
    %v924 = vsel %vm722, 1.0, 0.0
    %v925 = vsel %vm723, 1.0, 0.0
    %v926 = vsel %vm724, 1.0, 0.0
    %v927 = vsel %vm725, 1.0, 0.0
    %v928 = vsel %vm726, 1.0, 0.0
    %v929 = vsel %vm727, 1.0, 0.0
    %v930 = vsel %vm728, 1.0, 0.0
    %v931 = vsel %vm729, 1.0, 0.0
    %v932 = vsel %vm730, 1.0, 0.0
    %v933 = vsel %vm731, 1.0, 0.0
    %v934 = vsel %vm732, 1.0, 0.0
    %v935 = vsel %vm733, 1.0, 0.0
    %v936 = vsel %vm734, 1.0, 0.0
    %v937 = vsel %vm735, 1.0, 0.0
    %v938 = vsel %vm736, 1.0, 0.0
    %v939 = vsel %vm737, 1.0, 0.0
    %v940 = vsel %vm738, 1.0, 0.0
    %v941 = vsel %vm739, 1.0, 0.0
    %v942 = vsel %vm740, 1.0, 0.0
    %v943 = vsel %vm741, 1.0, 0.0
    %v944 = vsel %vm742, 1.0, 0.0
    %v945 = vsel %vm743, 1.0, 0.0
    %v946 = vsel %vm744, 1.0, 0.0
    %v947 = vsel %vm745, 1.0, 0.0
    %v948 = vsel %vm746, 1.0, 0.0
    %v949 = vsel %vm747, 1.0, 0.0
    %v950 = vsel %vm748, 1.0, 0.0
    %v951 = vsel %vm749, 1.0, 0.0
    %v952 = vsel %vm750, 1.0, 0.0
    %v953 = vsel %vm751, 1.0, 0.0
    %v954 = vsel %vm752, 1.0, 0.0
    %v955 = vsel %vm753, 1.0, 0.0
    %v956 = vsel %vm754, 1.0, 0.0
    %v957 = vsel %vm755, 1.0, 0.0
    %v958 = vsel %vm756, 1.0, 0.0
    %v959 = vsel %vm757, 1.0, 0.0
    %v960 = vsel %vm758, 1.0, 0.0
    %v961 = vsel %vm759, 1.0, 0.0
    %v962 = vsel %vm760, 1.0, 0.0
    %v963 = vsel %vm761, 1.0, 0.0
    %v964 = vsel %vm762, 1.0, 0.0
    %v965 = vsel %vm763, 1.0, 0.0
    %v966 = vsel %vm764, 1.0, 0.0
    %v967 = vsel %vm765, 1.0, 0.0
    %v968 = vsel %vm766, 1.0, 0.0
    %v969 = vsel %vm767, 1.0, 0.0
    %v970 = vsel %vm768, 1.0, 0.0
    %v971 = vsel %vm769, 1.0, 0.0
    %v972 = vsel %vm770, 1.0, 0.0
    %v973 = vsel %vm771, 1.0, 0.0
    %v974 = vsel %vm772, 1.0, 0.0
    %v975 = vsel %vm773, 1.0, 0.0
    %v976 = vsel %vm774, 1.0, 0.0
    %v977 = vsel %vm775, 1.0, 0.0
    %v978 = vsel %vm776, 1.0, 0.0
    %v979 = vsel %vm777, 1.0, 0.0
    %v980 = vsel %vm778, 1.0, 0.0
    %v981 = vsel %vm779, 1.0, 0.0
    %v982 = vsel %vm780, 1.0, 0.0
    %v983 = vsel %vm781, 1.0, 0.0
    %v984 = vsel %vm782, 1.0, 0.0
    %v985 = vsel %vm783, 1.0, 0.0
    %v986 = vsel %vm784, 1.0, 0.0
    %v987 = vsel %vm785, 1.0, 0.0
    %v988 = vsel %vm786, 1.0, 0.0
    %v989 = vsel %vm787, 1.0, 0.0
    %v990 = vsel %vm788, 1.0, 0.0
    %v991 = vsel %vm789, 1.0, 0.0
    %v992 = vsel %vm790, 1.0, 0.0
    %v993 = vsel %vm791, 1.0, 0.0
    %v994 = vsel %vm792, 1.0, 0.0
    %v995 = vsel %vm793, 1.0, 0.0
    %v996 = vsel %vm794, 1.0, 0.0
    %v997 = vsel %vm795, 1.0, 0.0
    %v998 = vsel %vm796, 1.0, 0.0
    %v999 = vsel %vm797, 1.0, 0.0
    %v1000 = vsel %vm798, 1.0, 0.0
    %v1001 = vsel %vm799, 1.0, 0.0
    %v1002 = vsel %vm800, 1.0, 0.0
    %v1003 = vsel %vm801, 1.0, 0.0
    %v1004 = vsel %vm802, 1.0, 0.0
    %v1005 = vsel %vm803, 1.0, 0.0
    %v1006 = vsel %vm804, 1.0, 0.0
    %v1007 = vsel %vm805, 1.0, 0.0
    %v1008 = vsel %vm806, 1.0, 0.0
    %v1009 = vsel %vm807, 1.0, 0.0
    %v1010 = vsel %vm808, 1.0, 0.0
    %v1011 = vsel %vm809, 1.0, 0.0
    %v1012 = vsel %vm810, 1.0, 0.0
    %v1013 = vsel %vm811, 1.0, 0.0
    %v1014 = vsel %vm812, 1.0, 0.0
    %v1015 = vsel %vm813, 1.0, 0.0
    %v1016 = vsel %vm814, 1.0, 0.0
    %v1017 = vsel %vm815, 1.0, 0.0
    %v1018 = vsel %vm816, 1.0, 0.0
    %v1019 = vsel %vm817, 1.0, 0.0
    %v1020 = vsel %vm818, 1.0, 0.0
    %v1021 = vsel %vm819, 1.0, 0.0
    %v1022 = vsel %vm820, 1.0, 0.0
    %v1023 = vsel %vm821, 1.0, 0.0
    %v1024 = vsel %vm822, 1.0, 0.0
    %v1025 = vsel %vm823, 1.0, 0.0
    %v1026 = vsel %vm824, 1.0, 0.0
    %v1027 = vsel %vm825, 1.0, 0.0
    %v1028 = vsel %vm826, 1.0, 0.0
    %v1029 = vsel %vm827, 1.0, 0.0
    %v1030 = vsel %vm828, 1.0, 0.0
    %v1031 = vsel %vm829, 1.0, 0.0
    %v1032 = vsel %vm830, 1.0, 0.0
    %v1033 = vsel %vm831, 1.0, 0.0
    %v1034 = vsel %vm832, 1.0, 0.0
    %v1035 = vsel %vm833, 1.0, 0.0
    %v1036 = vsel %vm834, 1.0, 0.0
    %v1037 = vsel %vm835, 1.0, 0.0
    %v1038 = vsel %vm836, 1.0, 0.0
    %v1039 = vsel %vm837, 1.0, 0.0
    %v1040 = vsel %vm838, 1.0, 0.0
    %v1041 = vsel %vm839, 1.0, 0.0
    %v1042 = vsel %vm840, 1.0, 0.0
    %v1043 = vsel %vm841, 1.0, 0.0
    %v1044 = vsel %vm842, 1.0, 0.0
    %v1045 = vsel %vm843, 1.0, 0.0
    %v1046 = vsel %vm844, 1.0, 0.0
    %v1047 = vsel %vm845, 1.0, 0.0
    %v1048 = vsel %vm846, 1.0, 0.0
    %v1049 = vsel %vm847, 1.0, 0.0
    %v1050 = vsel %vm848, 1.0, 0.0
    %v1051 = vsel %vm849, 1.0, 0.0
    %v1052 = vsel %vm850, 1.0, 0.0
    %v1053 = vsel %vm851, 1.0, 0.0
    %v1054 = vsel %vm852, 1.0, 0.0
    %v1055 = vsel %vm853, 1.0, 0.0
    %v1056 = vsel %vm854, 1.0, 0.0
    %v1057 = vsel %vm855, 1.0, 0.0
    %v1058 = vsel %vm856, 1.0, 0.0
    %v1059 = vsel %vm857, 1.0, 0.0
    %v1060 = vsel %vm858, 1.0, 0.0
    %v1061 = vsel %vm859, 1.0, 0.0
    loop: start=0, step=1, limit=8
    $region46: #{cnnet_forward.1} parent=1 // loop_pre_header
      _
    $region47: #{cnnet_forward.1} parent=1 // loop_header
      %s1063 = sphi 0, %s1067
      %p1064 = scmp.ge.s32.totalorder %s1063, 8
    $region48: #{cnnet_forward.1} parent=1 // loop_header_branch
      %1066 = sbr.rel (%p1064) target = $region52
    $region49: #{cnnet_forward.1} parent=1 // loop_body
      %s1068 = smul.u32 %s1063, 128
      %s1069 = sld [smem:[#allocation4 + %s1068]]
      %v1070 = vld [vmem:[#allocation2] sm:$0xff]
      %v1071 = vld [vmem:[#allocation2 + $0x8] sm:$0xff]
      %v1072 = vld [vmem:[#allocation2 + $0x10] sm:$0xff]
      %v1073 = vld [vmem:[#allocation2 + $0x18] sm:$0xff]
      %v1074 = vld [vmem:[#allocation2 + $0x20] sm:$0xff]
      %v1075 = vld [vmem:[#allocation2 + $0x28] sm:$0xff]
      %v1076 = vld [vmem:[#allocation2 + $0x30] sm:$0xff]
      %v1077 = vstv %s1069
      %v1078 = vmul.f32 %v1077, %v1070
      %v1079 = vmul.f32 %v1077, %v1071
      %v1080 = vmul.f32 %v1077, %v1072
      %v1081 = vmul.f32 %v1077, %v1073
      %v1082 = vmul.f32 %v1077, %v1074
      %v1083 = vmul.f32 %v1077, %v1075
      %v1084 = vmul.f32 %v1077, %v1076
      %v1085 = vadd.f32 %v1078, 0.0
      %v1086 = vadd.f32 %v1079, 0.0
      %v1087 = vadd.f32 %v1080, 0.0
      %v1088 = vadd.f32 %v1081, 0.0
      %v1089 = vadd.f32 %v1082, 0.0
      %v1090 = vadd.f32 %v1083, 0.0
      %v1091 = vadd.f32 %v1084, 0.0
      %s1092 = sadd.s32 %s1068, 1
      %s1093 = sld [smem:[#allocation4 + %s1092]]
      %v1094 = vstv %s1093
      %v1095 = vmul.f32 %v1094, %v1070
      %v1096 = vmul.f32 %v1094, %v1071
      %v1097 = vmul.f32 %v1094, %v1072
      %v1098 = vmul.f32 %v1094, %v1073
      %v1099 = vmul.f32 %v1094, %v1074
      %v1100 = vmul.f32 %v1094, %v1075
      %v1101 = vmul.f32 %v1094, %v1076
      %1109 = vrot.lane.b32.xlu0 %v1095, 127
      %v1110 = vpop.permute.xlu0 %1109
      %1111 = vrot.lane.b32.xlu0 %v1096, 127
      %v1112 = vpop.permute.xlu0 %1111
      %1113 = vrot.lane.b32.xlu0 %v1097, 127
      %v1114 = vpop.permute.xlu0 %1113
      %1115 = vrot.lane.b32.xlu0 %v1098, 127
      %v1116 = vpop.permute.xlu0 %1115
      %1117 = vrot.lane.b32.xlu0 %v1099, 127
      %v1118 = vpop.permute.xlu0 %1117
      %1119 = vrot.lane.b32.xlu0 %v1100, 127
      %v1120 = vpop.permute.xlu0 %1119
      %1121 = vrot.lane.b32.xlu0 %v1101, 127
      %v1122 = vpop.permute.xlu0 %1121
      %vm1123 = vcmask 1039360
      %v1124 = vsel %vm1123, %v1110, %v1112
      %v1125 = vsel %vm1123, %v1112, %v1114
      %v1126 = vsel %vm1123, %v1114, %v1116
      %v1127 = vsel %vm1123, %v1116, %v1118
      %v1128 = vsel %vm1123, %v1118, %v1120
      %v1129 = vsel %vm1123, %v1120, %v1122
      %v1137 = vadd.f32 %v1085, %v1124
      %v1138 = vadd.f32 %v1086, %v1125
      %v1139 = vadd.f32 %v1087, %v1126
      %v1140 = vadd.f32 %v1088, %v1127
      %v1141 = vadd.f32 %v1089, %v1128
      %v1142 = vadd.f32 %v1090, %v1129
      %v1143 = vadd.f32 %v1091, %v1122
      %s1144 = sadd.s32 %s1068, 2
      %s1145 = sld [smem:[#allocation4 + %s1144]]
      %v1146 = vstv %s1145
      %v1147 = vmul.f32 %v1146, %v1070
      %v1148 = vmul.f32 %v1146, %v1071
      %v1149 = vmul.f32 %v1146, %v1072
      %v1150 = vmul.f32 %v1146, %v1073
      %v1151 = vmul.f32 %v1146, %v1074
      %v1152 = vmul.f32 %v1146, %v1075
      %v1153 = vmul.f32 %v1146, %v1076
      %1161 = vrot.lane.b32.xlu0 %v1147, 126
      %v1162 = vpop.permute.xlu0 %1161
      %1163 = vrot.lane.b32.xlu0 %v1148, 126
      %v1164 = vpop.permute.xlu0 %1163
      %1165 = vrot.lane.b32.xlu0 %v1149, 126
      %v1166 = vpop.permute.xlu0 %1165
      %1167 = vrot.lane.b32.xlu0 %v1150, 126
      %v1168 = vpop.permute.xlu0 %1167
      %1169 = vrot.lane.b32.xlu0 %v1151, 126
      %v1170 = vpop.permute.xlu0 %1169
      %1171 = vrot.lane.b32.xlu0 %v1152, 126
      %v1172 = vpop.permute.xlu0 %1171
      %1173 = vrot.lane.b32.xlu0 %v1153, 126
      %v1174 = vpop.permute.xlu0 %1173
      %vm1175 = vcmask 1031168
      %v1176 = vsel %vm1175, %v1162, %v1164
      %v1177 = vsel %vm1175, %v1164, %v1166
      %v1178 = vsel %vm1175, %v1166, %v1168
      %v1179 = vsel %vm1175, %v1168, %v1170
      %v1180 = vsel %vm1175, %v1170, %v1172
      %v1181 = vsel %vm1175, %v1172, %v1174
      %v1189 = vadd.f32 %v1137, %v1176
      %v1190 = vadd.f32 %v1138, %v1177
      %v1191 = vadd.f32 %v1139, %v1178
      %v1192 = vadd.f32 %v1140, %v1179
      %v1193 = vadd.f32 %v1141, %v1180
      %v1194 = vadd.f32 %v1142, %v1181
      %v1195 = vadd.f32 %v1143, %v1174
      %s1196 = sadd.s32 %s1068, 3
      %s1197 = sld [smem:[#allocation4 + %s1196]]
      %v1198 = vstv %s1197
      %v1199 = vmul.f32 %v1198, %v1070
      %v1200 = vmul.f32 %v1198, %v1071
      %v1201 = vmul.f32 %v1198, %v1072
      %v1202 = vmul.f32 %v1198, %v1073
      %v1203 = vmul.f32 %v1198, %v1074
      %v1204 = vmul.f32 %v1198, %v1075
      %v1205 = vmul.f32 %v1198, %v1076
      %1213 = vrot.lane.b32.xlu0 %v1199, 98
      %v1214 = vpop.permute.xlu0 %1213
      %1215 = vrot.lane.b32.xlu0 %v1200, 98
      %v1216 = vpop.permute.xlu0 %1215
      %1217 = vrot.lane.b32.xlu0 %v1201, 98
      %v1218 = vpop.permute.xlu0 %1217
      %1219 = vrot.lane.b32.xlu0 %v1202, 98
      %v1220 = vpop.permute.xlu0 %1219
      %1221 = vrot.lane.b32.xlu0 %v1203, 98
      %v1222 = vpop.permute.xlu0 %1221
      %1223 = vrot.lane.b32.xlu0 %v1204, 98
      %v1224 = vpop.permute.xlu0 %1223
      %1225 = vrot.lane.b32.xlu0 %v1205, 98
      %v1226 = vpop.permute.xlu0 %1225
      %vm1227 = vcmask 801792
      %v1228 = vsel %vm1227, %v1214, %v1216
      %v1229 = vsel %vm1227, %v1216, %v1218
      %v1230 = vsel %vm1227, %v1218, %v1220
      %v1231 = vsel %vm1227, %v1220, %v1222
      %v1232 = vsel %vm1227, %v1222, %v1224
      %v1233 = vsel %vm1227, %v1224, %v1226
      %v1241 = vadd.f32 %v1189, %v1228
      %v1242 = vadd.f32 %v1190, %v1229
      %v1243 = vadd.f32 %v1191, %v1230
      %v1244 = vadd.f32 %v1192, %v1231
      %v1245 = vadd.f32 %v1193, %v1232
      %v1246 = vadd.f32 %v1194, %v1233
      %v1247 = vadd.f32 %v1195, %v1226
      %s1248 = sadd.s32 %s1068, 4
      %s1249 = sld [smem:[#allocation4 + %s1248]]
      %v1250 = vstv %s1249
      %v1251 = vmul.f32 %v1250, %v1070
      %v1252 = vmul.f32 %v1250, %v1071
      %v1253 = vmul.f32 %v1250, %v1072
      %v1254 = vmul.f32 %v1250, %v1073
      %v1255 = vmul.f32 %v1250, %v1074
      %v1256 = vmul.f32 %v1250, %v1075
      %v1257 = vmul.f32 %v1250, %v1076
      %1265 = vrot.lane.b32.xlu0 %v1251, 97
      %v1266 = vpop.permute.xlu0 %1265
      %1267 = vrot.lane.b32.xlu0 %v1252, 97
      %v1268 = vpop.permute.xlu0 %1267
      %1269 = vrot.lane.b32.xlu0 %v1253, 97
      %v1270 = vpop.permute.xlu0 %1269
      %1271 = vrot.lane.b32.xlu0 %v1254, 97
      %v1272 = vpop.permute.xlu0 %1271
      %1273 = vrot.lane.b32.xlu0 %v1255, 97
      %v1274 = vpop.permute.xlu0 %1273
      %1275 = vrot.lane.b32.xlu0 %v1256, 97
      %v1276 = vpop.permute.xlu0 %1275
      %1277 = vrot.lane.b32.xlu0 %v1257, 97
      %v1278 = vpop.permute.xlu0 %1277
      %vm1279 = vcmask 793600
      %v1280 = vsel %vm1279, %v1266, %v1268
      %v1281 = vsel %vm1279, %v1268, %v1270
      %v1282 = vsel %vm1279, %v1270, %v1272
      %v1283 = vsel %vm1279, %v1272, %v1274
      %v1284 = vsel %vm1279, %v1274, %v1276
      %v1285 = vsel %vm1279, %v1276, %v1278
      %v1293 = vadd.f32 %v1241, %v1280
      %v1294 = vadd.f32 %v1242, %v1281
      %v1295 = vadd.f32 %v1243, %v1282
      %v1296 = vadd.f32 %v1244, %v1283
      %v1297 = vadd.f32 %v1245, %v1284
      %v1298 = vadd.f32 %v1246, %v1285
      %v1299 = vadd.f32 %v1247, %v1278
      %s1300 = sadd.s32 %s1068, 5
      %s1301 = sld [smem:[#allocation4 + %s1300]]
      %v1302 = vstv %s1301
      %v1303 = vmul.f32 %v1302, %v1070
      %v1304 = vmul.f32 %v1302, %v1071
      %v1305 = vmul.f32 %v1302, %v1072
      %v1306 = vmul.f32 %v1302, %v1073
      %v1307 = vmul.f32 %v1302, %v1074
      %v1308 = vmul.f32 %v1302, %v1075
      %v1309 = vmul.f32 %v1302, %v1076
      %1317 = vrot.lane.b32.xlu0 %v1303, 96
      %v1318 = vpop.permute.xlu0 %1317
      %1319 = vrot.lane.b32.xlu0 %v1304, 96
      %v1320 = vpop.permute.xlu0 %1319
      %1321 = vrot.lane.b32.xlu0 %v1305, 96
      %v1322 = vpop.permute.xlu0 %1321
      %1323 = vrot.lane.b32.xlu0 %v1306, 96
      %v1324 = vpop.permute.xlu0 %1323
      %1325 = vrot.lane.b32.xlu0 %v1307, 96
      %v1326 = vpop.permute.xlu0 %1325
      %1327 = vrot.lane.b32.xlu0 %v1308, 96
      %v1328 = vpop.permute.xlu0 %1327
      %1329 = vrot.lane.b32.xlu0 %v1309, 96
      %v1330 = vpop.permute.xlu0 %1329
      %vm1331 = vcmask 785408
      %v1332 = vsel %vm1331, %v1318, %v1320
      %v1333 = vsel %vm1331, %v1320, %v1322
      %v1334 = vsel %vm1331, %v1322, %v1324
      %v1335 = vsel %vm1331, %v1324, %v1326
      %v1336 = vsel %vm1331, %v1326, %v1328
      %v1337 = vsel %vm1331, %v1328, %v1330
      %v1345 = vadd.f32 %v1293, %v1332
      %v1346 = vadd.f32 %v1294, %v1333
      %v1347 = vadd.f32 %v1295, %v1334
      %v1348 = vadd.f32 %v1296, %v1335
      %v1349 = vadd.f32 %v1297, %v1336
      %v1350 = vadd.f32 %v1298, %v1337
      %v1351 = vadd.f32 %v1299, %v1330
      %s1352 = sadd.s32 %s1068, 6
      %s1353 = sld [smem:[#allocation4 + %s1352]]
      %v1354 = vld [vmem:[#allocation2] sm:$0xff]
      %v1355 = vld [vmem:[#allocation2 + $0x8] sm:$0xff]
      %v1356 = vld [vmem:[#allocation2 + $0x10] sm:$0xff]
      %v1357 = vld [vmem:[#allocation2 + $0x18] sm:$0xff]
      %v1358 = vld [vmem:[#allocation2 + $0x20] sm:$0xff]
      %v1359 = vld [vmem:[#allocation2 + $0x28] sm:$0xff]
      %v1360 = vld [vmem:[#allocation2 + $0x30] sm:$0xff]
      %v1361 = vld [vmem:[#allocation2 + $0x38] sm:$0xff]
      %v1362 = vstv %s1353
      %v1363 = vmul.f32 %v1362, %v1354
      %v1364 = vmul.f32 %v1362, %v1355
      %v1365 = vmul.f32 %v1362, %v1356
      %v1366 = vmul.f32 %v1362, %v1357
      %v1367 = vmul.f32 %v1362, %v1358
      %v1368 = vmul.f32 %v1362, %v1359
      %v1369 = vmul.f32 %v1362, %v1360
      %v1370 = vmul.f32 %v1362, %v1361
      %1379 = vrot.lane.b32.xlu0 %v1363, 68
      %v1380 = vpop.permute.xlu0 %1379
      %1381 = vrot.lane.b32.xlu0 %v1364, 68
      %v1382 = vpop.permute.xlu0 %1381
      %1383 = vrot.lane.b32.xlu0 %v1365, 68
      %v1384 = vpop.permute.xlu0 %1383
      %1385 = vrot.lane.b32.xlu0 %v1366, 68
      %v1386 = vpop.permute.xlu0 %1385
      %1387 = vrot.lane.b32.xlu0 %v1367, 68
      %v1388 = vpop.permute.xlu0 %1387
      %1389 = vrot.lane.b32.xlu0 %v1368, 68
      %v1390 = vpop.permute.xlu0 %1389
      %1391 = vrot.lane.b32.xlu0 %v1369, 68
      %v1392 = vpop.permute.xlu0 %1391
      %1393 = vrot.lane.b32.xlu0 %v1370, 68
      %v1394 = vpop.permute.xlu0 %1393
      %vm1395 = vcmask 556032
      %v1396 = vsel %vm1395, %v1380, %v1382
      %v1397 = vsel %vm1395, %v1382, %v1384
      %v1398 = vsel %vm1395, %v1384, %v1386
      %v1399 = vsel %vm1395, %v1386, %v1388
      %v1400 = vsel %vm1395, %v1388, %v1390
      %v1401 = vsel %vm1395, %v1390, %v1392
      %v1402 = vsel %vm1395, %v1392, %v1394
      %v1410 = vadd.f32 %v1345, %v1396
      %v1411 = vadd.f32 %v1346, %v1397
      %v1412 = vadd.f32 %v1347, %v1398
      %v1413 = vadd.f32 %v1348, %v1399
      %v1414 = vadd.f32 %v1349, %v1400
      %v1415 = vadd.f32 %v1350, %v1401
      %v1416 = vadd.f32 %v1351, %v1402
      %s1417 = sadd.s32 %s1068, 7
      %s1418 = sld [smem:[#allocation4 + %s1417]]
      %v1419 = vstv %s1418
      %v1420 = vmul.f32 %v1419, %v1354
      %v1421 = vmul.f32 %v1419, %v1355
      %v1422 = vmul.f32 %v1419, %v1356
      %v1423 = vmul.f32 %v1419, %v1357
      %v1424 = vmul.f32 %v1419, %v1358
      %v1425 = vmul.f32 %v1419, %v1359
      %v1426 = vmul.f32 %v1419, %v1360
      %v1427 = vmul.f32 %v1419, %v1361
      %1436 = vrot.lane.b32.xlu0 %v1420, 67
      %v1437 = vpop.permute.xlu0 %1436
      %1438 = vrot.lane.b32.xlu0 %v1421, 67
      %v1439 = vpop.permute.xlu0 %1438
      %1440 = vrot.lane.b32.xlu0 %v1422, 67
      %v1441 = vpop.permute.xlu0 %1440
      %1442 = vrot.lane.b32.xlu0 %v1423, 67
      %v1443 = vpop.permute.xlu0 %1442
      %1444 = vrot.lane.b32.xlu0 %v1424, 67
      %v1445 = vpop.permute.xlu0 %1444
      %1446 = vrot.lane.b32.xlu0 %v1425, 67
      %v1447 = vpop.permute.xlu0 %1446
      %1448 = vrot.lane.b32.xlu0 %v1426, 67
      %v1449 = vpop.permute.xlu0 %1448
      %1450 = vrot.lane.b32.xlu0 %v1427, 67
      %v1451 = vpop.permute.xlu0 %1450
      %v1452 = vsel %vm245, %v1437, %v1439
      %v1453 = vsel %vm245, %v1439, %v1441
      %v1454 = vsel %vm245, %v1441, %v1443
      %v1455 = vsel %vm245, %v1443, %v1445
      %v1456 = vsel %vm245, %v1445, %v1447
      %v1457 = vsel %vm245, %v1447, %v1449
      %v1458 = vsel %vm245, %v1449, %v1451
      %v1466 = vadd.f32 %v1410, %v1452
      %v1467 = vadd.f32 %v1411, %v1453
      %v1468 = vadd.f32 %v1412, %v1454
      %v1469 = vadd.f32 %v1413, %v1455
      %v1470 = vadd.f32 %v1414, %v1456
      %v1471 = vadd.f32 %v1415, %v1457
      %v1472 = vadd.f32 %v1416, %v1458
      %s1473 = sadd.s32 %s1068, 8
      %s1474 = sld [smem:[#allocation4 + %s1473]]
      %v1475 = vstv %s1474
      %v1476 = vmul.f32 %v1475, %v1354
      %v1477 = vmul.f32 %v1475, %v1355
      %v1478 = vmul.f32 %v1475, %v1356
      %v1479 = vmul.f32 %v1475, %v1357
      %v1480 = vmul.f32 %v1475, %v1358
      %v1481 = vmul.f32 %v1475, %v1359
      %v1482 = vmul.f32 %v1475, %v1360
      %v1483 = vmul.f32 %v1475, %v1361
      %1492 = vrot.lane.b32.xlu0 %v1476, 66
      %v1493 = vpop.permute.xlu0 %1492
      %1494 = vrot.lane.b32.xlu0 %v1477, 66
      %v1495 = vpop.permute.xlu0 %1494
      %1496 = vrot.lane.b32.xlu0 %v1478, 66
      %v1497 = vpop.permute.xlu0 %1496
      %1498 = vrot.lane.b32.xlu0 %v1479, 66
      %v1499 = vpop.permute.xlu0 %1498
      %1500 = vrot.lane.b32.xlu0 %v1480, 66
      %v1501 = vpop.permute.xlu0 %1500
      %1502 = vrot.lane.b32.xlu0 %v1481, 66
      %v1503 = vpop.permute.xlu0 %1502
      %1504 = vrot.lane.b32.xlu0 %v1482, 66
      %v1505 = vpop.permute.xlu0 %1504
      %1506 = vrot.lane.b32.xlu0 %v1483, 66
      %v1507 = vpop.permute.xlu0 %1506
      %vm1508 = vcmask 539648
      %v1509 = vsel %vm1508, %v1493, %v1495
      %v1510 = vsel %vm1508, %v1495, %v1497
      %v1511 = vsel %vm1508, %v1497, %v1499
      %v1512 = vsel %vm1508, %v1499, %v1501
      %v1513 = vsel %vm1508, %v1501, %v1503
      %v1514 = vsel %vm1508, %v1503, %v1505
      %v1515 = vsel %vm1508, %v1505, %v1507
      %v1523 = vadd.f32 %v1466, %v1509
      %v1524 = vadd.f32 %v1467, %v1510
      %v1525 = vadd.f32 %v1468, %v1511
      %v1526 = vadd.f32 %v1469, %v1512
      %v1527 = vadd.f32 %v1470, %v1513
      %v1528 = vadd.f32 %v1471, %v1514
      %v1529 = vadd.f32 %v1472, %v1515
      %s1530 = sld [smem:[#allocation6 + %s1063]]
      %v1531 = vstv %s1530
      %v1532 = vadd.f32 %v1523, %v1531
      %v1533 = vadd.f32 %v1524, %v1531
      %v1534 = vadd.f32 %v1525, %v1531
      %v1535 = vadd.f32 %v1526, %v1531
      %v1536 = vadd.f32 %v1527, %v1531
      %v1537 = vadd.f32 %v1528, %v1531
      %v1538 = vadd.f32 %v1529, %v1531
      %v1539 = vmax.f32 %v1532, 0.0
      %v1540 = vmax.f32 %v1533, 0.0
      %v1541 = vmax.f32 %v1534, 0.0
      %v1542 = vmax.f32 %v1535, 0.0
      %v1543 = vmax.f32 %v1536, 0.0
      %v1544 = vmax.f32 %v1537, 0.0
      %v1545 = vmax.f32 %v1538, 0.0
      %1553 = vrot.lane.b32.xlu0 %v1539, 127
      %v1554 = vpop.permute.xlu0 %1553
      %1555 = vrot.lane.b32.xlu0 %v1540, 127
      %v1556 = vpop.permute.xlu0 %1555
      %1557 = vrot.lane.b32.xlu0 %v1541, 127
      %v1558 = vpop.permute.xlu0 %1557
      %1559 = vrot.lane.b32.xlu0 %v1542, 127
      %v1560 = vpop.permute.xlu0 %1559
      %1561 = vrot.lane.b32.xlu0 %v1543, 127
      %v1562 = vpop.permute.xlu0 %1561
      %1563 = vrot.lane.b32.xlu0 %v1544, 127
      %v1564 = vpop.permute.xlu0 %1563
      %1565 = vrot.lane.b32.xlu0 %v1545, 127
      %v1566 = vpop.permute.xlu0 %1565
      %v1567 = vsel %vm1123, %v1554, %v1556
      %v1568 = vsel %vm1123, %v1556, %v1558
      %v1569 = vsel %vm1123, %v1558, %v1560
      %v1570 = vsel %vm1123, %v1560, %v1562
      %v1571 = vsel %vm1123, %v1562, %v1564
      %v1572 = vsel %vm1123, %v1564, %v1566
      %v1580 = vmax.f32 %v1539, %v1567
      %v1581 = vmax.f32 %v1540, %v1568
      %v1582 = vmax.f32 %v1541, %v1569
      %v1583 = vmax.f32 %v1542, %v1570
      %v1584 = vmax.f32 %v1543, %v1571
      %v1585 = vmax.f32 %v1544, %v1572
      %v1586 = vmax.f32 %v1545, %v1566
      %1594 = vrot.lane.b32.xlu0 %v1580, 98
      %v1595 = vpop.permute.xlu0 %1594
      %1596 = vrot.lane.b32.xlu0 %v1581, 98
      %v1597 = vpop.permute.xlu0 %1596
      %1598 = vrot.lane.b32.xlu0 %v1582, 98
      %v1599 = vpop.permute.xlu0 %1598
      %1600 = vrot.lane.b32.xlu0 %v1583, 98
      %v1601 = vpop.permute.xlu0 %1600
      %1602 = vrot.lane.b32.xlu0 %v1584, 98
      %v1603 = vpop.permute.xlu0 %1602
      %1604 = vrot.lane.b32.xlu0 %v1585, 98
      %v1605 = vpop.permute.xlu0 %1604
      %1606 = vrot.lane.b32.xlu0 %v1586, 98
      %v1607 = vpop.permute.xlu0 %1606
      %v1608 = vsel %vm1227, %v1595, %v1597
      %v1609 = vsel %vm1227, %v1597, %v1599
      %v1610 = vsel %vm1227, %v1599, %v1601
      %v1611 = vsel %vm1227, %v1601, %v1603
      %v1612 = vsel %vm1227, %v1603, %v1605
      %v1613 = vsel %vm1227, %v1605, %v1607
      %v1621 = vmax.f32 %v1580, %v1608
      %v1622 = vmax.f32 %v1581, %v1609
      %v1623 = vmax.f32 %v1582, %v1610
      %v1624 = vmax.f32 %v1583, %v1611
      %v1625 = vmax.f32 %v1584, %v1612
      %v1626 = vmax.f32 %v1585, %v1613
      %v1627 = vmax.f32 %v1586, %v1607
      %v1629 = vsel %vm123, %v1627, 0
      %vm1631 = vcmask 1046528
      %v1633 = vsel %vm1631, %v1060, 0
      %v1636 = vsel %vm1631, %v1061, 0
      %1638 = vmatprep.subr.mxu0 %v891
      %1639 = vmatpush1.msra.mxu0 %v890
      %1640 = vmatprep.subr.mxu0 %v889
      %1641 = vmatpush1.msra.mxu0 %v888
      %1642 = vmatprep.subr.mxu0 %v887
      %1643 = vmatpush1.msra.mxu0 %v886
      %1644 = vmatprep.subr.mxu0 %v885
      %1645 = vmatpush1.msra.mxu0 %v884
      %1646 = vmatprep.subr.mxu0 %v883
      %1647 = vmatpush1.msra.mxu0 %v882
      %1648 = vmatprep.subr.mxu0 %v881
      %1649 = vmatpush1.msra.mxu0 %v880
      %1650 = vmatprep.subr.mxu0 %v879
      %1651 = vmatpush1.msra.mxu0 %v878
      %1652 = vmatprep.subr.mxu0 %v877
      %1653 = vmatpush1.msra.mxu0 %v876
      %1654 = vmatprep.subr.mxu0 %v875
      %1655 = vmatpush1.msra.mxu0 %v874
      %1656 = vmatprep.subr.mxu0 %v873
      %1657 = vmatpush1.msra.mxu0 %v872
      %1658 = vmatprep.subr.mxu0 %v871
      %1659 = vmatpush1.msra.mxu0 %v870
      %1660 = vmatprep.subr.mxu0 %v869
      %1661 = vmatpush1.msra.mxu0 %v868
      %1662 = vmatprep.subr.mxu0 %v867
      %1663 = vmatpush1.msra.mxu0 %v866
      %1664 = vmatprep.subr.mxu0 %v865
      %1665 = vmatpush1.msra.mxu0 %v864
      %1666 = vmatprep.subr.mxu0 %v863
      %1667 = vmatpush1.msra.mxu0 %v862
      %1668 = vmatprep.subr.mxu0 %v861
      %1669 = vmatpush1.msra.mxu0 %v860
      %1670 = vmatprep.subr.mxu0 %v923
      %1671 = vmatpush2.msra.mxu0 %v922
      %1672 = vmatprep.subr.mxu0 %v921
      %1673 = vmatpush2.msra.mxu0 %v920
      %1674 = vmatprep.subr.mxu0 %v919
      %1675 = vmatpush2.msra.mxu0 %v918
      %1676 = vmatprep.subr.mxu0 %v917
      %1677 = vmatpush2.msra.mxu0 %v916
      %1678 = vmatprep.subr.mxu0 %v915
      %1679 = vmatpush2.msra.mxu0 %v914
      %1680 = vmatprep.subr.mxu0 %v913
      %1681 = vmatpush2.msra.mxu0 %v912
      %1682 = vmatprep.subr.mxu0 %v911
      %1683 = vmatpush2.msra.mxu0 %v910
      %1684 = vmatprep.subr.mxu0 %v909
      %1685 = vmatpush2.msra.mxu0 %v908
      %1686 = vmatprep.subr.mxu0 %v907
      %1687 = vmatpush2.msra.mxu0 %v906
      %1688 = vmatprep.subr.mxu0 %v905
      %1689 = vmatpush2.msra.mxu0 %v904
      %1690 = vmatprep.subr.mxu0 %v903
      %1691 = vmatpush2.msra.mxu0 %v902
      %1692 = vmatprep.subr.mxu0 %v901
      %1693 = vmatpush2.msra.mxu0 %v900
      %1694 = vmatprep.subr.mxu0 %v899
      %1695 = vmatpush2.msra.mxu0 %v898
      %1696 = vmatprep.subr.mxu0 %v897
      %1697 = vmatpush2.msra.mxu0 %v896
      %1698 = vmatprep.subr.mxu0 %v895
      %1699 = vmatpush2.msra.mxu0 %v894
      %1700 = vmatprep.subr.mxu0 %v893
      %1701 = vmatpush2.msra.mxu0 %v892
      %1702 = vmatprep.mubr.f32.mxu0 %v1622
      %1703 = vmatmul.mubr.f32.gmra.mxu0 %v1621
      %v1704 = vpop.f32.mrf.mxu0
      %v1705 = vadd.f32 0.0, %v1704
      %v1706 = vpop.f32.mrf.mxu0
      %v1707 = vadd.f32 0.0, %v1706
      %1708 = vdwg.mxu0
      %1709 = vmatprep.subr.mxu0 %v955
      %1710 = vmatpush1.msra.mxu0 %v954
      %1711 = vmatprep.subr.mxu0 %v953
      %1712 = vmatpush1.msra.mxu0 %v952
      %1713 = vmatprep.subr.mxu0 %v951
      %1714 = vmatpush1.msra.mxu0 %v950
      %1715 = vmatprep.subr.mxu0 %v949
      %1716 = vmatpush1.msra.mxu0 %v948
      %1717 = vmatprep.subr.mxu0 %v947
      %1718 = vmatpush1.msra.mxu0 %v946
      %1719 = vmatprep.subr.mxu0 %v945
      %1720 = vmatpush1.msra.mxu0 %v944
      %1721 = vmatprep.subr.mxu0 %v943
      %1722 = vmatpush1.msra.mxu0 %v942
      %1723 = vmatprep.subr.mxu0 %v941
      %1724 = vmatpush1.msra.mxu0 %v940
      %1725 = vmatprep.subr.mxu0 %v939
      %1726 = vmatpush1.msra.mxu0 %v938
      %1727 = vmatprep.subr.mxu0 %v937
      %1728 = vmatpush1.msra.mxu0 %v936
      %1729 = vmatprep.subr.mxu0 %v935
      %1730 = vmatpush1.msra.mxu0 %v934
      %1731 = vmatprep.subr.mxu0 %v933
      %1732 = vmatpush1.msra.mxu0 %v932
      %1733 = vmatprep.subr.mxu0 %v931
      %1734 = vmatpush1.msra.mxu0 %v930
      %1735 = vmatprep.subr.mxu0 %v929
      %1736 = vmatpush1.msra.mxu0 %v928
      %1737 = vmatprep.subr.mxu0 %v927
      %1738 = vmatpush1.msra.mxu0 %v926
      %1739 = vmatprep.subr.mxu0 %v925
      %1740 = vmatpush1.msra.mxu0 %v924
      %1741 = vmatprep.subr.mxu0 %v987
      %1742 = vmatpush2.msra.mxu0 %v986
      %1743 = vmatprep.subr.mxu0 %v985
      %1744 = vmatpush2.msra.mxu0 %v984
      %1745 = vmatprep.subr.mxu0 %v983
      %1746 = vmatpush2.msra.mxu0 %v982
      %1747 = vmatprep.subr.mxu0 %v981
      %1748 = vmatpush2.msra.mxu0 %v980
      %1749 = vmatprep.subr.mxu0 %v979
      %1750 = vmatpush2.msra.mxu0 %v978
      %1751 = vmatprep.subr.mxu0 %v977
      %1752 = vmatpush2.msra.mxu0 %v976
      %1753 = vmatprep.subr.mxu0 %v975
      %1754 = vmatpush2.msra.mxu0 %v974
      %1755 = vmatprep.subr.mxu0 %v973
      %1756 = vmatpush2.msra.mxu0 %v972
      %1757 = vmatprep.subr.mxu0 %v971
      %1758 = vmatpush2.msra.mxu0 %v970
      %1759 = vmatprep.subr.mxu0 %v969
      %1760 = vmatpush2.msra.mxu0 %v968
      %1761 = vmatprep.subr.mxu0 %v967
      %1762 = vmatpush2.msra.mxu0 %v966
      %1763 = vmatprep.subr.mxu0 %v965
      %1764 = vmatpush2.msra.mxu0 %v964
      %1765 = vmatprep.subr.mxu0 %v963
      %1766 = vmatpush2.msra.mxu0 %v962
      %1767 = vmatprep.subr.mxu0 %v961
      %1768 = vmatpush2.msra.mxu0 %v960
      %1769 = vmatprep.subr.mxu0 %v959
      %1770 = vmatpush2.msra.mxu0 %v958
      %1771 = vmatprep.subr.mxu0 %v957
      %1772 = vmatpush2.msra.mxu0 %v956
      %1773 = vmatprep.mubr.f32.mxu0 %v1624
      %1774 = vmatmul.mubr.f32.gmra.mxu0 %v1623
      %v1775 = vpop.f32.mrf.mxu0
      %v1776 = vadd.f32 %v1705, %v1775
      %v1777 = vpop.f32.mrf.mxu0
      %v1778 = vadd.f32 %v1707, %v1777
      %1779 = vdwg.mxu0
      %1780 = vmatprep.subr.mxu0 %v1019
      %1781 = vmatpush1.msra.mxu0 %v1018
      %1782 = vmatprep.subr.mxu0 %v1017
      %1783 = vmatpush1.msra.mxu0 %v1016
      %1784 = vmatprep.subr.mxu0 %v1015
      %1785 = vmatpush1.msra.mxu0 %v1014
      %1786 = vmatprep.subr.mxu0 %v1013
      %1787 = vmatpush1.msra.mxu0 %v1012
      %1788 = vmatprep.subr.mxu0 %v1011
      %1789 = vmatpush1.msra.mxu0 %v1010
      %1790 = vmatprep.subr.mxu0 %v1009
      %1791 = vmatpush1.msra.mxu0 %v1008
      %1792 = vmatprep.subr.mxu0 %v1007
      %1793 = vmatpush1.msra.mxu0 %v1006
      %1794 = vmatprep.subr.mxu0 %v1005
      %1795 = vmatpush1.msra.mxu0 %v1004
      %1796 = vmatprep.subr.mxu0 %v1003
      %1797 = vmatpush1.msra.mxu0 %v1002
      %1798 = vmatprep.subr.mxu0 %v1001
      %1799 = vmatpush1.msra.mxu0 %v1000
      %1800 = vmatprep.subr.mxu0 %v999
      %1801 = vmatpush1.msra.mxu0 %v998
      %1802 = vmatprep.subr.mxu0 %v997
      %1803 = vmatpush1.msra.mxu0 %v996
      %1804 = vmatprep.subr.mxu0 %v995
      %1805 = vmatpush1.msra.mxu0 %v994
      %1806 = vmatprep.subr.mxu0 %v993
      %1807 = vmatpush1.msra.mxu0 %v992
      %1808 = vmatprep.subr.mxu0 %v991
      %1809 = vmatpush1.msra.mxu0 %v990
      %1810 = vmatprep.subr.mxu0 %v989
      %1811 = vmatpush1.msra.mxu0 %v988
      %1812 = vmatprep.subr.mxu0 %v1051
      %1813 = vmatpush2.msra.mxu0 %v1050
      %1814 = vmatprep.subr.mxu0 %v1049
      %1815 = vmatpush2.msra.mxu0 %v1048
      %1816 = vmatprep.subr.mxu0 %v1047
      %1817 = vmatpush2.msra.mxu0 %v1046
      %1818 = vmatprep.subr.mxu0 %v1045
      %1819 = vmatpush2.msra.mxu0 %v1044
      %1820 = vmatprep.subr.mxu0 %v1043
      %1821 = vmatpush2.msra.mxu0 %v1042
      %1822 = vmatprep.subr.mxu0 %v1041
      %1823 = vmatpush2.msra.mxu0 %v1040
      %1824 = vmatprep.subr.mxu0 %v1039
      %1825 = vmatpush2.msra.mxu0 %v1038
      %1826 = vmatprep.subr.mxu0 %v1037
      %1827 = vmatpush2.msra.mxu0 %v1036
      %1828 = vmatprep.subr.mxu0 %v1035
      %1829 = vmatpush2.msra.mxu0 %v1034
      %1830 = vmatprep.subr.mxu0 %v1033
      %1831 = vmatpush2.msra.mxu0 %v1032
      %1832 = vmatprep.subr.mxu0 %v1031
      %1833 = vmatpush2.msra.mxu0 %v1030
      %1834 = vmatprep.subr.mxu0 %v1029
      %1835 = vmatpush2.msra.mxu0 %v1028
      %1836 = vmatprep.subr.mxu0 %v1027
      %1837 = vmatpush2.msra.mxu0 %v1026
      %1838 = vmatprep.subr.mxu0 %v1025
      %1839 = vmatpush2.msra.mxu0 %v1024
      %1840 = vmatprep.subr.mxu0 %v1023
      %1841 = vmatpush2.msra.mxu0 %v1022
      %1842 = vmatprep.subr.mxu0 %v1021
      %1843 = vmatpush2.msra.mxu0 %v1020
      %1844 = vmatprep.mubr.f32.mxu0 %v1626
      %1845 = vmatmul.mubr.f32.gmra.mxu0 %v1625
      %v1846 = vpop.f32.mrf.mxu0
      %v1847 = vadd.f32 %v1776, %v1846
      %v1848 = vpop.f32.mrf.mxu0
      %v1849 = vadd.f32 %v1778, %v1848
      %1850 = vdwg.mxu0
      %1851 = vmatprep.subr.mxu0 0.0
      %1852 = vmatpush1.msra.mxu0 0.0
      %1853 = vmatprep.subr.mxu0 0.0
      %1854 = vmatpush1.msra.mxu0 0.0
      %1855 = vmatprep.subr.mxu0 0.0
      %1856 = vmatpush1.msra.mxu0 0.0
      %1857 = vmatprep.subr.mxu0 0.0
      %1858 = vmatpush1.msra.mxu0 0.0
      %1859 = vmatprep.subr.mxu0 0.0
      %1860 = vmatpush1.msra.mxu0 0.0
      %1861 = vmatprep.subr.mxu0 0.0
      %1862 = vmatpush1.msra.mxu0 0.0
      %1863 = vmatprep.subr.mxu0 0.0
      %1864 = vmatpush1.msra.mxu0 0.0
      %1865 = vmatprep.subr.mxu0 0.0
      %1866 = vmatpush1.msra.mxu0 0.0
      %1867 = vmatprep.subr.mxu0 0.0
      %1868 = vmatpush1.msra.mxu0 0.0
      %1869 = vmatprep.subr.mxu0 0.0
      %1870 = vmatpush1.msra.mxu0 0.0
      %1871 = vmatprep.subr.mxu0 0.0
      %1872 = vmatpush1.msra.mxu0 0.0
      %1873 = vmatprep.subr.mxu0 %v1636
      %1874 = vmatpush1.msra.mxu0 %v1633
      %1875 = vmatprep.subr.mxu0 %v1059
      %1876 = vmatpush1.msra.mxu0 %v1058
      %1877 = vmatprep.subr.mxu0 %v1057
      %1878 = vmatpush1.msra.mxu0 %v1056
      %1879 = vmatprep.subr.mxu0 %v1055
      %1880 = vmatpush1.msra.mxu0 %v1054
      %1881 = vmatprep.subr.mxu0 %v1053
      %1882 = vmatpush1.msra.mxu0 %v1052
      %1883 = vmatprep.subr.mxu0 0.0
      %1884 = vmatpush2.msra.mxu0 0.0
      %1885 = vmatprep.subr.mxu0 0.0
      %1886 = vmatpush2.msra.mxu0 0.0
      %1887 = vmatprep.subr.mxu0 0.0
      %1888 = vmatpush2.msra.mxu0 0.0
      %1889 = vmatprep.subr.mxu0 0.0
      %1890 = vmatpush2.msra.mxu0 0.0
      %1891 = vmatprep.subr.mxu0 0.0
      %1892 = vmatpush2.msra.mxu0 0.0
      %1893 = vmatprep.subr.mxu0 0.0
      %1894 = vmatpush2.msra.mxu0 0.0
      %1895 = vmatprep.subr.mxu0 0.0
      %1896 = vmatpush2.msra.mxu0 0.0
      %1897 = vmatprep.subr.mxu0 0.0
      %1898 = vmatpush2.msra.mxu0 0.0
      %1899 = vmatprep.subr.mxu0 0.0
      %1900 = vmatpush2.msra.mxu0 0.0
      %1901 = vmatprep.subr.mxu0 0.0
      %1902 = vmatpush2.msra.mxu0 0.0
      %1903 = vmatprep.subr.mxu0 0.0
      %1904 = vmatpush2.msra.mxu0 0.0
      %1905 = vmatprep.subr.mxu0 0.0
      %1906 = vmatpush2.msra.mxu0 0.0
      %1907 = vmatprep.subr.mxu0 0.0
      %1908 = vmatpush2.msra.mxu0 0.0
      %1909 = vmatprep.subr.mxu0 0.0
      %1910 = vmatpush2.msra.mxu0 0.0
      %1911 = vmatprep.subr.mxu0 0.0
      %1912 = vmatpush2.msra.mxu0 0.0
      %1913 = vmatprep.subr.mxu0 0.0
      %1914 = vmatpush2.msra.mxu0 0.0
      %1915 = vmatprep.mubr.f32.mxu0 0.0
      %1916 = vmatmul.mubr.f32.gmra.mxu0 %v1629
      %v1917 = vpop.f32.mrf.mxu0
      %v1918 = vadd.f32 %v1847, %v1917
      %v1919 = vpop.f32.mrf.mxu0
      %v1920 = vadd.f32 %v1849, %v1919
      %1921 = vdwg.mxu0
      %s1922 = smul.u32 %s1063, 2
      %s1923 = smul.addr %s1922, 8
      %s1924 = scalar_lea.vmem [#allocation3], %s1923
      %1925 = vst [vmem:[%s1924] sm:$0xff] %v1918
      %1926 = vst [vmem:[%s1924 + $0x8] sm:$0xff] %v1920
    $region50: #{cnnet_forward.1} parent=1 // loop_footer
      %s1067 = sadd.s32 1, %s1063
    $region51: #{cnnet_forward.1} parent=1 // loop_footer_branch
      %1062 = sbr.rel target = $region47
    $region52: #{cnnet_forward.1} parent=1 // loop_exit
      _
    loop: start=0, step=1, limit=16
    $region53: #{cnnet_forward.1} parent=1 // loop_pre_header
      _
    $region54: #{cnnet_forward.1} parent=1 // loop_header
      %s1928 = sphi 0, %s1932
      %p1929 = scmp.ge.s32.totalorder %s1928, 16
      %v1933 = vphi 0.0, %v2267
    $region55: #{cnnet_forward.1} parent=1 // loop_header_branch
      %1931 = sbr.rel (%p1929) target = $region59
    $region56: #{cnnet_forward.1} parent=1 // loop_body
      loop: start=0, step=1, limit=8
      $region60: #{cnnet_forward.1} parent=56 // loop_pre_header
        _
      $region61: #{cnnet_forward.1} parent=56 // loop_header
        %s1935 = sphi 0, %s1939
        %p1936 = scmp.ge.s32.totalorder %s1935, 8
        %v1940 = vphi 0.0, %v2151
        %v1941 = vphi 0.0, %v2152
      $region62: #{cnnet_forward.1} parent=56 // loop_header_branch
        %1938 = sbr.rel (%p1936) target = $region66
      $region63: #{cnnet_forward.1} parent=56 // loop_body
        %s1942 = smul.u32 %s1935, 9
        %s1943 = sshra.s32 %s1942, 7
        %s1944 = sand.u32 %s1942, 127
        %s1945 = sadd.s32 %s1943, %s1928
        %s1946 = smul.u32 %s1945, 128
        %s1947 = sshra.s32 %s1942, 7
        %s1948 = sand.u32 %s1942, 127
        %s1949 = sadd.s32 %s1946, %s1948
        %s1950 = sld [smem:[#allocation8 + %s1949]]
        %s1951 = smul.u32 %s1935, 2
        %s1952 = smul.addr %s1951, 8
        %s1953 = scalar_lea.vmem [#allocation3], %s1952
        %v1954 = vld [vmem:[%s1953] sm:$0xff]
        %v1955 = vld [vmem:[%s1953 + $0x8] sm:$0xff]
        %v1956 = vstv %s1950
        %v1957 = vmul.f32 %v1956, %v1954
        %v1958 = vmul.f32 %v1956, %v1955
        %v1959 = vadd.f32 %v1940, %v1957
        %v1960 = vadd.f32 %v1941, %v1958
        %s1961 = sadd.s32 %s1942, 1
        %s1962 = sshra.s32 %s1961, 7
        %s1963 = sand.u32 %s1961, 127
        %s1964 = sadd.s32 %s1962, %s1928
        %s1965 = smul.u32 %s1964, 128
        %s1966 = sshra.s32 %s1961, 7
        %s1967 = sand.u32 %s1961, 127
        %s1968 = sadd.s32 %s1965, %s1967
        %s1969 = sld [smem:[#allocation8 + %s1968]]
        %v1970 = vstv %s1969
        %v1971 = vmul.f32 %v1970, %v1954
        %v1972 = vmul.f32 %v1970, %v1955
        %1975 = vrot.lane.b32.xlu0 %v1971, 127
        %v1976 = vpop.permute.xlu0 %1975
        %1977 = vrot.lane.b32.xlu0 %v1972, 127
        %v1978 = vpop.permute.xlu0 %1977
        %vm1979 = vcmask 1039360
        %v1980 = vsel %vm1979, %v1976, %v1978
        %v1983 = vadd.f32 %v1959, %v1980
        %v1984 = vadd.f32 %v1960, %v1978
        %s1985 = sadd.s32 %s1942, 2
        %s1986 = sshra.s32 %s1985, 7
        %s1987 = sand.u32 %s1985, 127
        %s1988 = sadd.s32 %s1986, %s1928
        %s1989 = smul.u32 %s1988, 128
        %s1990 = sshra.s32 %s1985, 7
        %s1991 = sand.u32 %s1985, 127
        %s1992 = sadd.s32 %s1989, %s1991
        %s1993 = sld [smem:[#allocation8 + %s1992]]
        %v1994 = vstv %s1993
        %v1995 = vmul.f32 %v1994, %v1954
        %v1996 = vmul.f32 %v1994, %v1955
        %1999 = vrot.lane.b32.xlu0 %v1995, 126
        %v2000 = vpop.permute.xlu0 %1999
        %2001 = vrot.lane.b32.xlu0 %v1996, 126
        %v2002 = vpop.permute.xlu0 %2001
        %vm2003 = vcmask 1031168
        %v2004 = vsel %vm2003, %v2000, %v2002
        %v2007 = vadd.f32 %v1983, %v2004
        %v2008 = vadd.f32 %v1984, %v2002
        %s2009 = sadd.s32 %s1942, 3
        %s2010 = sshra.s32 %s2009, 7
        %s2011 = sand.u32 %s2009, 127
        %s2012 = sadd.s32 %s2010, %s1928
        %s2013 = smul.u32 %s2012, 128
        %s2014 = sshra.s32 %s2009, 7
        %s2015 = sand.u32 %s2009, 127
        %s2016 = sadd.s32 %s2013, %s2015
        %s2017 = sld [smem:[#allocation8 + %s2016]]
        %v2018 = vstv %s2017
        %v2019 = vmul.f32 %v2018, %v1954
        %v2020 = vmul.f32 %v2018, %v1955
        %2023 = vrot.lane.b32.xlu0 %v2019, 112
        %v2024 = vpop.permute.xlu0 %2023
        %2025 = vrot.lane.b32.xlu0 %v2020, 112
        %v2026 = vpop.permute.xlu0 %2025
        %vm2027 = vcmask 916480
        %v2028 = vsel %vm2027, %v2024, %v2026
        %v2031 = vadd.f32 %v2007, %v2028
        %v2032 = vadd.f32 %v2008, %v2026
        %s2033 = sadd.s32 %s1942, 4
        %s2034 = sshra.s32 %s2033, 7
        %s2035 = sand.u32 %s2033, 127
        %s2036 = sadd.s32 %s2034, %s1928
        %s2037 = smul.u32 %s2036, 128
        %s2038 = sshra.s32 %s2033, 7
        %s2039 = sand.u32 %s2033, 127
        %s2040 = sadd.s32 %s2037, %s2039
        %s2041 = sld [smem:[#allocation8 + %s2040]]
        %v2042 = vstv %s2041
        %v2043 = vmul.f32 %v2042, %v1954
        %v2044 = vmul.f32 %v2042, %v1955
        %2047 = vrot.lane.b32.xlu0 %v2043, 111
        %v2048 = vpop.permute.xlu0 %2047
        %2049 = vrot.lane.b32.xlu0 %v2044, 111
        %v2050 = vpop.permute.xlu0 %2049
        %vm2051 = vcmask 908288
        %v2052 = vsel %vm2051, %v2048, %v2050
        %v2055 = vadd.f32 %v2031, %v2052
        %v2056 = vadd.f32 %v2032, %v2050
        %s2057 = sadd.s32 %s1942, 5
        %s2058 = sshra.s32 %s2057, 7
        %s2059 = sand.u32 %s2057, 127
        %s2060 = sadd.s32 %s2058, %s1928
        %s2061 = smul.u32 %s2060, 128
        %s2062 = sshra.s32 %s2057, 7
        %s2063 = sand.u32 %s2057, 127
        %s2064 = sadd.s32 %s2061, %s2063
        %s2065 = sld [smem:[#allocation8 + %s2064]]
        %v2066 = vstv %s2065
        %v2067 = vmul.f32 %v2066, %v1954
        %v2068 = vmul.f32 %v2066, %v1955
        %2071 = vrot.lane.b32.xlu0 %v2067, 110
        %v2072 = vpop.permute.xlu0 %2071
        %2073 = vrot.lane.b32.xlu0 %v2068, 110
        %v2074 = vpop.permute.xlu0 %2073
        %vm2075 = vcmask 900096
        %v2076 = vsel %vm2075, %v2072, %v2074
        %v2079 = vadd.f32 %v2055, %v2076
        %v2080 = vadd.f32 %v2056, %v2074
        %s2081 = sadd.s32 %s1942, 6
        %s2082 = sshra.s32 %s2081, 7
        %s2083 = sand.u32 %s2081, 127
        %s2084 = sadd.s32 %s2082, %s1928
        %s2085 = smul.u32 %s2084, 128
        %s2086 = sshra.s32 %s2081, 7
        %s2087 = sand.u32 %s2081, 127
        %s2088 = sadd.s32 %s2085, %s2087
        %s2089 = sld [smem:[#allocation8 + %s2088]]
        %v2090 = vstv %s2089
        %v2091 = vmul.f32 %v2090, %v1954
        %v2092 = vmul.f32 %v2090, %v1955
        %2095 = vrot.lane.b32.xlu0 %v2091, 96
        %v2096 = vpop.permute.xlu0 %2095
        %2097 = vrot.lane.b32.xlu0 %v2092, 96
        %v2098 = vpop.permute.xlu0 %2097
        %vm2099 = vcmask 785408
        %v2100 = vsel %vm2099, %v2096, %v2098
        %v2103 = vadd.f32 %v2079, %v2100
        %v2104 = vadd.f32 %v2080, %v2098
        %s2105 = sadd.s32 %s1942, 7
        %s2106 = sshra.s32 %s2105, 7
        %s2107 = sand.u32 %s2105, 127
        %s2108 = sadd.s32 %s2106, %s1928
        %s2109 = smul.u32 %s2108, 128
        %s2110 = sshra.s32 %s2105, 7
        %s2111 = sand.u32 %s2105, 127
        %s2112 = sadd.s32 %s2109, %s2111
        %s2113 = sld [smem:[#allocation8 + %s2112]]
        %v2114 = vstv %s2113
        %v2115 = vmul.f32 %v2114, %v1954
        %v2116 = vmul.f32 %v2114, %v1955
        %2119 = vrot.lane.b32.xlu0 %v2115, 95
        %v2120 = vpop.permute.xlu0 %2119
        %2121 = vrot.lane.b32.xlu0 %v2116, 95
        %v2122 = vpop.permute.xlu0 %2121
        %vm2123 = vcmask 777216
        %v2124 = vsel %vm2123, %v2120, %v2122
        %v2127 = vadd.f32 %v2103, %v2124
        %v2128 = vadd.f32 %v2104, %v2122
        %s2129 = sadd.s32 %s1942, 8
        %s2130 = sshra.s32 %s2129, 7
        %s2131 = sand.u32 %s2129, 127
        %s2132 = sadd.s32 %s2130, %s1928
        %s2133 = smul.u32 %s2132, 128
        %s2134 = sshra.s32 %s2129, 7
        %s2135 = sand.u32 %s2129, 127
        %s2136 = sadd.s32 %s2133, %s2135
        %s2137 = sld [smem:[#allocation8 + %s2136]]
        %v2138 = vstv %s2137
        %v2139 = vmul.f32 %v2138, %v1954
        %v2140 = vmul.f32 %v2138, %v1955
        %2143 = vrot.lane.b32.xlu0 %v2139, 94
        %v2144 = vpop.permute.xlu0 %2143
        %2145 = vrot.lane.b32.xlu0 %v2140, 94
        %v2146 = vpop.permute.xlu0 %2145
        %vm2147 = vcmask 769024
        %v2148 = vsel %vm2147, %v2144, %v2146
        %v2151 = vadd.f32 %v2127, %v2148
        %v2152 = vadd.f32 %v2128, %v2146
      $region64: #{cnnet_forward.1} parent=56 // loop_footer
        %s1939 = sadd.s32 1, %s1935
      $region65: #{cnnet_forward.1} parent=56 // loop_footer_branch
        %1934 = sbr.rel target = $region61
      $region66: #{cnnet_forward.1} parent=56 // loop_exit
        _
      %s2153 = sld [smem:[#allocation9 + %s1928]]
      %v2154 = vstv %s2153
      %v2155 = vadd.f32 %v1940, %v2154
      %v2156 = vadd.f32 %v1941, %v2154
      %v2157 = vmax.f32 %v2155, 0.0
      %v2158 = vmax.f32 %v2156, 0.0
      %s2159 = smul.u32 %s1928, 224
      %s2160 = scalar_lea.vmem %s5, %s2159
      %v2161 = vld [vmem:[%s2160] sm:$0xff]
      %v2162 = vld [vmem:[%s2160 + $0x8] sm:$0xff]
      %v2163 = vld [vmem:[%s2160 + $0x10] sm:$0xff]
      %v2164 = vld [vmem:[%s2160 + $0x18] sm:$0xff]
      %v2165 = vld [vmem:[%s2160 + $0x20] sm:$0xff]
      %v2166 = vld [vmem:[%s2160 + $0x28] sm:$0xff]
      %v2167 = vld [vmem:[%s2160 + $0x30] sm:$0xff]
      %v2168 = vld [vmem:[%s2160 + $0x38] sm:$0xff]
      %v2169 = vld [vmem:[%s2160 + $0x40] sm:$0xff]
      %v2170 = vld [vmem:[%s2160 + $0x48] sm:$0xff]
      %v2171 = vld [vmem:[%s2160 + $0x50] sm:$0xff]
      %v2172 = vld [vmem:[%s2160 + $0x58] sm:$0xff]
      %v2173 = vld [vmem:[%s2160 + $0x60] sm:$0xff]
      %v2174 = vld [vmem:[%s2160 + $0x68] sm:$0xff]
      %v2175 = vld [vmem:[%s2160 + $0x70] sm:$0xff]
      %v2176 = vld [vmem:[%s2160 + $0x78] sm:$0xff]
      %v2177 = vld [vmem:[%s2160 + $0x80] sm:$0xff]
      %v2178 = vld [vmem:[%s2160 + $0x88] sm:$0xff]
      %v2179 = vld [vmem:[%s2160 + $0x90] sm:$0xff]
      %v2180 = vld [vmem:[%s2160 + $0x98] sm:$0xff]
      %v2181 = vld [vmem:[%s2160 + $0xa0] sm:$0xff]
      %v2182 = vld [vmem:[%s2160 + $0xa8] sm:$0xff]
      %v2183 = vld [vmem:[%s2160 + $0xb0] sm:$0xff]
      %v2184 = vld [vmem:[%s2160 + $0xb8] sm:$0xff]
      %v2185 = vld [vmem:[%s2160 + $0xc0] sm:$0xff]
      %v2186 = vld [vmem:[%s2160 + $0xc8] sm:$0xff]
      %v2187 = vld [vmem:[%s2160 + $0xd0] sm:$0xff]
      %v2188 = vld [vmem:[%s2160 + $0xd8] sm:$0x3f]
      %vm2189 = vcmask 769024
      %v2191 = vsel %vm2189, %v2158, 0
      %vm2193 = vcmask 1045504
      %v2195 = vsel %vm2193, %v2188, 0
      %2197 = vmatprep.subr.mxu0 0.0
      %2198 = vmatpush1.msra.mxu0 %v2176
      %2199 = vmatprep.subr.mxu0 0.0
      %2200 = vmatpush1.msra.mxu0 %v2175
      %2201 = vmatprep.subr.mxu0 0.0
      %2202 = vmatpush1.msra.mxu0 %v2174
      %2203 = vmatprep.subr.mxu0 0.0
      %2204 = vmatpush1.msra.mxu0 %v2173
      %2205 = vmatprep.subr.mxu0 0.0
      %2206 = vmatpush1.msra.mxu0 %v2172
      %2207 = vmatprep.subr.mxu0 0.0
      %2208 = vmatpush1.msra.mxu0 %v2171
      %2209 = vmatprep.subr.mxu0 0.0
      %2210 = vmatpush1.msra.mxu0 %v2170
      %2211 = vmatprep.subr.mxu0 0.0
      %2212 = vmatpush1.msra.mxu0 %v2169
      %2213 = vmatprep.subr.mxu0 0.0
      %2214 = vmatpush1.msra.mxu0 %v2168
      %2215 = vmatprep.subr.mxu0 0.0
      %2216 = vmatpush1.msra.mxu0 %v2167
      %2217 = vmatprep.subr.mxu0 0.0
      %2218 = vmatpush1.msra.mxu0 %v2166
      %2219 = vmatprep.subr.mxu0 0.0
      %2220 = vmatpush1.msra.mxu0 %v2165
      %2221 = vmatprep.subr.mxu0 0.0
      %2222 = vmatpush1.msra.mxu0 %v2164
      %2223 = vmatprep.subr.mxu0 0.0
      %2224 = vmatpush1.msra.mxu0 %v2163
      %2225 = vmatprep.subr.mxu0 0.0
      %2226 = vmatpush1.msra.mxu0 %v2162
      %2227 = vmatprep.subr.mxu0 0.0
      %2228 = vmatpush1.msra.mxu0 %v2161
      %2229 = vmatprep.subr.mxu0 0.0
      %2230 = vmatpush2.msra.mxu0 0.0
      %2231 = vmatprep.subr.mxu0 0.0
      %2232 = vmatpush2.msra.mxu0 0.0
      %2233 = vmatprep.subr.mxu0 0.0
      %2234 = vmatpush2.msra.mxu0 0.0
      %2235 = vmatprep.subr.mxu0 0.0
      %2236 = vmatpush2.msra.mxu0 0.0
      %2237 = vmatprep.subr.mxu0 0.0
      %2238 = vmatpush2.msra.mxu0 %v2195
      %2239 = vmatprep.subr.mxu0 0.0
      %2240 = vmatpush2.msra.mxu0 %v2187
      %2241 = vmatprep.subr.mxu0 0.0
      %2242 = vmatpush2.msra.mxu0 %v2186
      %2243 = vmatprep.subr.mxu0 0.0
      %2244 = vmatpush2.msra.mxu0 %v2185
      %2245 = vmatprep.subr.mxu0 0.0
      %2246 = vmatpush2.msra.mxu0 %v2184
      %2247 = vmatprep.subr.mxu0 0.0
      %2248 = vmatpush2.msra.mxu0 %v2183
      %2249 = vmatprep.subr.mxu0 0.0
      %2250 = vmatpush2.msra.mxu0 %v2182
      %2251 = vmatprep.subr.mxu0 0.0
      %2252 = vmatpush2.msra.mxu0 %v2181
      %2253 = vmatprep.subr.mxu0 0.0
      %2254 = vmatpush2.msra.mxu0 %v2180
      %2255 = vmatprep.subr.mxu0 0.0
      %2256 = vmatpush2.msra.mxu0 %v2179
      %2257 = vmatprep.subr.mxu0 0.0
      %2258 = vmatpush2.msra.mxu0 %v2178
      %2259 = vmatprep.subr.mxu0 0.0
      %2260 = vmatpush2.msra.mxu0 %v2177
      %2261 = vmatprep.mubr.f32.mxu0 %v2191
      %2262 = vmatmul.mubr.f32.gmra.mxu0 %v2157
      %v2263 = vpop.f32.mrf.mxu0
      %v2264 = vadd.f32 0.0, %v2263
      %v2265 = vpop.f32.mrf.mxu0
      %2266 = vdwg.mxu0
      %v2267 = vadd.f32 %v1933, %v2264
    $region57: #{cnnet_forward.1} parent=1 // loop_footer
      %s1932 = sadd.s32 1, %s1928
    $region58: #{cnnet_forward.1} parent=1 // loop_footer_branch
      %1927 = sbr.rel target = $region54
    $region59: #{cnnet_forward.1} parent=1 // loop_exit
      _
    %v2268 = vld [vmem:[%s6] sm:$0x1]
    %v2270 = vlaneseq
    %v2271 = vshrl.u32 %v2270, 7
    %v2272 = vsub.s32 0, %v2271
    %v2273 = vrot.slane %v2268, %v2272
    %v2275 = vadd.f32 %v1933, %v2273
    %2276 = vmax.xlane.f32.xlu0 %v2275
    %v2277 = vpop.xlane.xlu0 %2276
    %v2278 = vsub.f32 %v2275, %v2277
    %v2279 = vmul.f32 %v2278, 1.442695
    %v2280 = vpow.pop %v2279
    %2281 = vadd.xlane.f32.xlu0 %v2280
    %v2282 = vpop.xlane.xlu0 %2281
    %v2283 = vrcp.pop %v2282
    %v2284 = vmul.f32 %v2280, %v2283
    %2285 = vst [vmem:[%s7] sm:$0xff] %v2284
    // Predicated region
    $region67: #{cnnet_forward.1} parent=1 // pred_check
      _
    $region68: #{cnnet_forward.1} parent=1 // pred_check_branch
      %2287 = sbr.rel (0) target = $region70
    $region69: #{cnnet_forward.1} parent=1 // pred_region
      _
    $region70: #{cnnet_forward.1} parent=1 // pred_fallthru
      _
    // Predicated region
    $region71: #{cnnet_forward.1} parent=1 // pred_check
      _
    $region72: #{cnnet_forward.1} parent=1 // pred_check_branch
      %2289 = sbr.rel (0) target = $region74
    $region73: #{cnnet_forward.1} parent=1 // pred_region
      _
    $region74: #{cnnet_forward.1} parent=1 // pred_fallthru
      _
    %2290 = vsyncpa [#allocation5], 1
    %2291 = vsyncpa [#allocation7], 1
    %2292 = vsyncpa [#allocation10], 1

</llo_original>
